<compile_context>
chip_gen: v7x
topology: tpu7x:2x2x1
jax: 0.10.0
libtpu: 0.0.40
codegen_flags: <defaults>
</compile_context>

<pallas_src>
import functools
import math

import jax
import jax.numpy as jnp
import numpy as np
from jax import lax
from jax.experimental import pallas as pl
from jax.experimental.pallas import tpu as pltpu

HIGH = jax.lax.Precision.HIGHEST  # only used by the pure-JAX reference


def graph_layer_kernel(
    z_ref, base_ref, mask_ref,
    wqkv_ref, bqkv_ref, wo_ref,
    g1_ref, b1_ref, g2_ref, b2_ref,
    wp1_ref, bp1_ref, wp2_ref, bp2_ref,
    out_ref,
    qkv_scratch, attn_scratch,
    *, bb, n, n_head, d_head, eps, neg_slope):
  d_model = n_head * d_head
  f32, bf16 = jnp.float32, jnp.bfloat16

  # ---- norm1: rows streamed as bf16, statistics in f32 ----
  z = z_ref[...].astype(f32)                          # (bb*n, d_model)
  mu = jnp.mean(z, axis=-1, keepdims=True)
  var = jnp.mean((z - mu) ** 2, axis=-1, keepdims=True)
  zn = (z - mu) * lax.rsqrt(var + eps)
  zn = zn * g1_ref[...] + b1_ref[...]

  # ---- fused QKV projection; grouped cols [V_all|Q_all|K_all], Q pre-scaled ----
  qkv = jnp.dot(zn.astype(bf16), wqkv_ref[...],
                preferred_element_type=f32) + bqkv_ref[...]
  qkv_scratch[...] = qkv          # park in VMEM so the batch loop can ref-slice

  # ---- attention: fori_loop over the batch elements in this block ----
  # TODO(synk): for large N, tile query rows with an online-softmax accumulator
  #             instead of materializing full (N, N) score tiles per head.
  # TODO(synk): at production d_head (multiple of 128), switch to a head-major
  #             layout + one batched dot_general and a multi-head score slab so
  #             the softmax runs at full lane occupancy.
  def attend(b, carry):
    start = pl.multiple_of(b * n, n)
    rows = pl.ds(start, n)
    base_b = base_ref[b].astype(f32)                  # (n, n) = new_mask - gamma_mask*D
    mask_b = mask_ref[b].astype(f32)                  # (n, n), 0/1 exact in bf16
    qkv_b = qkv_scratch[rows, :]                      # (n, 3*d_model) f32
    heads = []
    for h in range(n_head):                           # heads stay unrolled (small)
      c0 = h * d_head
      vh = qkv_b[:, c0:c0 + d_head]
      qh = qkv_b[:, d_model + c0:d_model + c0 + d_head]        # already /sqrt(d_head)
      kh = qkv_b[:, 2 * d_model + c0:2 * d_model + c0 + d_head]
      s = lax.dot_general(qh.astype(bf16), kh.astype(bf16),
                          (((1,), (1,)), ((), ())),
                          preferred_element_type=f32)
      s = s + base_b
      s = s - jnp.max(s, axis=-1, keepdims=True)
      e = jnp.exp(s)
      p = e * pl.reciprocal(jnp.sum(e, axis=-1, keepdims=True), approx=True)
      p = p * mask_b
      heads.append(jnp.dot(p.astype(bf16), vh.astype(bf16),
                           preferred_element_type=f32))
    # one lane-dense (n, d_model) store per batch element (no d_head-wide vst.msk)
    attn_scratch[rows, :] = jnp.concatenate(heads, axis=-1)
    return carry

  lax.fori_loop(0, bb, attend, 0)

  # ---- leaky_relu + o_net (no bias) + residual ----
  attn = attn_scratch[...]
  attn = jnp.where(attn > 0, attn, neg_slope * attn)
  o = jnp.dot(attn.astype(bf16), wo_ref[...], preferred_element_type=f32)
  z1 = o + z_ref[...].astype(f32)

  # ---- norm2 + MLP (relu) + residual ----
  mu2 = jnp.mean(z1, axis=-1, keepdims=True)
  var2 = jnp.mean((z1 - mu2) ** 2, axis=-1, keepdims=True)
  zn2 = (z1 - mu2) * lax.rsqrt(var2 + eps)
  zn2 = zn2 * g2_ref[...] + b2_ref[...]
  h1 = jnp.dot(zn2.astype(bf16), wp1_ref[...], preferred_element_type=f32) + bp1_ref[...]
  h1 = jnp.maximum(h1, 0.0)
  out_ref[...] = (jnp.dot(h1.astype(bf16), wp2_ref[...], preferred_element_type=f32)
                  + bp2_ref[...] + z1)


def graph_layer_pallas(Z, D, new_mask, mask, gamma_mask, params, *, n_head, d_head):
  bsz, n, dm = Z.shape
  d_inner = params["wp1_t"].shape[1]
  f32, bf16 = jnp.float32, jnp.bfloat16

  # Batch-block size: target ~256 matmul rows (fills the 256-wide MXU on
  # v6e/v7x), but always keep >= 2 grid steps so the pipeline can prefetch the
  # next mask tiles and both v7x TensorCores get work.
  bb = max(1, min(bsz, 256 // max(n, 1)))
  if bsz >= 2:
    bb = min(bb, bsz // 2)
  bb = max(bb, 1)
  while bsz % bb:   # NOTE: falls back towards bb=1 for awkward/prime bsz
    bb -= 1         #       (perf cliff only, still correct).

  # Pre-fused additive attention term, streamed in bf16: halves the dominant
  # (B,N,N) HBM traffic and the double-buffered mask VMEM.
  base = (new_mask - gamma_mask * D).astype(bf16)
  mask_bf = mask.astype(bf16)                  # 0/1 values are exact in bf16
  z2d = Z.reshape(bsz * n, dm).astype(bf16)
  # TODO(synk): pack base+mask into one uint32 (2x bf16) stream to halve the
  #             per-step mask DMA descriptor count.

  # Regroup fused-QKV columns from per-head interleaved [V_h|Q_h|K_h] to grouped
  # [V_all|Q_all|K_all] (contiguous in-kernel slices) and fold the 1/sqrt(d_head)
  # query scale into the Q columns of W and b.
  perm = np.concatenate([
      np.arange(h * 3 * d_head + g * d_head, h * 3 * d_head + (g + 1) * d_head)
      for g in range(3) for h in range(n_head)])
  qscale = np.concatenate([np.ones(dm), np.full(dm, 1.0 / math.sqrt(d_head)),
                           np.ones(dm)]).astype(np.float32)
  wqkv_g = (params["wqkv_t"][:, perm] * qscale[None, :]).astype(bf16)
  bqkv_g = (params["bqkv"][:, perm] * qscale[None, :]).astype(f32)

  # Matmul weights stream in bf16 (single-pass MXU); biases / LN params stay f32.
  wo = params["wo_t"].astype(bf16)
  wp1 = params["wp1_t"].astype(bf16)
  wp2 = params["wp2_t"].astype(bf16)

  kernel = functools.partial(graph_layer_kernel, bb=bb, n=n, n_head=n_head,
                             d_head=d_head, eps=1e-5, neg_slope=0.01)

  def rowblock(cols):
    return pl.BlockSpec((bb * n, cols), lambda i: (i, 0))

  def bmask():
    return pl.BlockSpec((bb, n, n), lambda i: (i, 0, 0))

  def full2(shape):
    # Grid-invariant operand (constant index_map): Pallas keeps the block
    # resident and skips re-copying across steps.
    # TODO(synk): pipeline_mode=pl.Buffered(1) to also drop the second buffer
    #             once validated on all target generations.
    return pl.BlockSpec(shape, lambda i: (0, 0))

  in_specs = [
      rowblock(dm),              # Z rows (bf16, batch rows folded)
      bmask(),                   # base = new_mask - gamma_mask*D (bf16)
      bmask(),                   # mask (bf16)
      full2((dm, 3 * dm)),       # W_qkv^T, grouped + Q-scaled (bf16)
      full2((1, 3 * dm)),        # b_qkv, grouped + Q-scaled (f32)
      full2((dm, dm)),           # W_o^T (bf16)
      full2((1, dm)),            # norm1 gamma (f32)
      full2((1, dm)),            # norm1 beta
      full2((1, dm)),            # norm2 gamma
      full2((1, dm)),            # norm2 beta
      full2((dm, d_inner)),      # W_proj1^T (bf16)
      full2((1, d_inner)),       # b_proj1
      full2((d_inner, dm)),      # W_proj2^T (bf16)
      full2((1, dm)),            # b_proj2
  ]

  out2d = pl.pallas_call(
      kernel,
      out_shape=jax.ShapeDtypeStruct((bsz * n, dm), f32),
      grid_spec=pltpu.PrefetchScalarGridSpec(
          num_scalar_prefetch=0,
          grid=(bsz // bb,),
          in_specs=in_specs,
          out_specs=rowblock(dm),
          scratch_shapes=[pltpu.VMEM((bb * n, 3 * dm), f32),   # fused QKV
                          pltpu.VMEM((bb * n, dm), f32)],      # attention out
      ),
      compiler_params=pltpu.CompilerParams(
          dimension_semantics=("parallel",),     # batch blocks are independent
          vmem_limit_bytes=48 * 1024 * 1024,     # raise v5e's 16 MiB scoped
      ),                                         # default; headroom under v7x 64 MiB
  )(z2d, base, mask_bf,
    wqkv_g, bqkv_g, wo,
    params["g1"], params["b1"], params["g2"], params["b2"],
    wp1, params["bp1"], wp2, params["bp2"])
  return out2d.reshape(bsz, n, dm)


def build_gamma_mask(D, gamma, slices):
  # glue: block assignment gamma_mask[:, slice_i, slice_j] = gamma[i, j]
  gm = jnp.ones_like(D)
  for i, si in enumerate(slices):
    for j, sj in enumerate(slices):
      gm = gm.at[:, si, sj].set(gamma[i, j])
  return gm


def reference(Z, D, new_mask, mask, gamma_mask, params, *, n_head, d_head):
  # plain-JAX mirror of the PyTorch forward (f32 HIGHEST), for validation.
  bsz, n, dm = Z.shape

  def ln(x, g, b):
    mu = x.mean(-1, keepdims=True)
    var = ((x - mu) ** 2).mean(-1, keepdims=True)
    return (x - mu) / jnp.sqrt(var + 1e-5) * g + b

  inp = Z
  zn = ln(Z, params["g1"][0], params["b1"][0])
  qkv = jnp.einsum("bnd,de->bne", zn, params["wqkv_t"], precision=HIGH) + params["bqkv"][0]
  qkv = qkv.reshape(bsz, n, n_head, 3 * d_head)
  Z2 = qkv[..., :d_head]
  Z3 = qkv[..., d_head:2 * d_head]
  Z4 = qkv[..., 2 * d_head:]
  W = (-(gamma_mask * D)[:, None]
       + jnp.einsum("bnij,bmij->binm", Z3, Z4, precision=HIGH) / math.sqrt(d_head)
       + new_mask[:, None])
  W = jax.nn.softmax(W, axis=3) * mask[:, None]
  attn = jnp.einsum("binm,bmij->bnij", W, Z2, precision=HIGH).reshape(bsz, n, dm)
  attn = jnp.where(attn > 0, attn, 0.01 * attn)
  attn = jnp.einsum("bnd,de->bne", attn, params["wo_t"], precision=HIGH)
  Z1 = attn + inp
  zn2 = ln(Z1, params["g2"][0], params["b2"][0])
  h = jnp.maximum(jnp.einsum("bnd,df->bnf", zn2, params["wp1_t"], precision=HIGH)
                  + params["bp1"][0], 0.0)
  return jnp.einsum("bnf,fd->bnd", h, params["wp2_t"], precision=HIGH) + params["bp2"][0] + Z1


if __name__ == "__main__":
  bsz, n_elem = 4, 16           # bsz=4 -> grid of 2 steps with bb=2 (exercises
  d_model, n_head, d_head, d_inner = 32, 4, 8, 64  # both pipeline + batch loop)
  assert d_model == n_head * d_head

  key = jax.random.PRNGKey(0)
  ks = jax.random.split(key, 16)

  # deterministic parameter init (shapes from GraphLayer.__init__)
  params = {
      "wqkv_t": (0.1 * jax.random.normal(ks[0], (3 * d_model, d_model))).T,  # qkv_net.weight^T
      "bqkv":   0.1 * jax.random.normal(ks[1], (1, 3 * d_model)),
      "wo_t":   (0.1 * jax.random.normal(ks[2], (d_model, n_head * d_head))).T,  # o_net (no bias)
      "g1":     jnp.ones((1, d_model)) + 0.1 * jax.random.normal(ks[3], (1, d_model)),
      "b1":     0.1 * jax.random.normal(ks[4], (1, d_model)),
      "g2":     jnp.ones((1, d_model)) + 0.1 * jax.random.normal(ks[5], (1, d_model)),
      "b2":     0.1 * jax.random.normal(ks[6], (1, d_model)),
      "wp1_t":  (0.1 * jax.random.normal(ks[7], (d_inner, d_model))).T,  # proj1.weight^T
      "bp1":    0.1 * jax.random.normal(ks[8], (1, d_inner)),
      "wp2_t":  (0.1 * jax.random.normal(ks[9], (d_model, d_inner))).T,  # proj2.weight^T
      "bp2":    0.1 * jax.random.normal(ks[10], (1, d_model)),
  }
  params = {k: v.astype(jnp.float32) for k, v in params.items()}
  gamma = (jnp.ones((4, 4)) + 0.2 * jax.random.normal(ks[11], (4, 4))).astype(jnp.float32)

  # inputs
  Z = jax.random.normal(ks[12], (bsz, n_elem, d_model), dtype=jnp.float32)
  D = jnp.abs(jax.random.normal(ks[13], (bsz, n_elem, n_elem), dtype=jnp.float32))
  new_mask = 0.1 * jax.random.normal(ks[14], (bsz, n_elem, n_elem)).astype(jnp.float32)
  mask = (jax.random.uniform(ks[15], (bsz, n_elem, n_elem)) > 0.3).astype(jnp.float32)

  # RA/RB/RT slices (use_quad=False -> RQ unused, matching default)
  RA, RB, RT = slice(0, 5), slice(5, 9), slice(9, 13)
  gamma_mask = build_gamma_mask(D, gamma, [RA, RB, RT])

  out = graph_layer_pallas(Z, D, new_mask, mask, gamma_mask, params,
                           n_head=n_head, d_head=d_head)
  out = jax.block_until_ready(out)

  ref = reference(Z, D, new_mask, mask, gamma_mask, params,
                  n_head=n_head, d_head=d_head)
  # Kernel streams Z/base/weights in bf16 and runs single-pass bf16 MXU matmuls
  # (per perf review) vs the f32-HIGHEST reference, so tolerance is 3e-2.
  np.testing.assert_allclose(np.asarray(out), np.asarray(ref), rtol=3e-2, atol=3e-2)

  # TODO(synk): `store=True` pickle dump, dropout with p>0, and wnorm weight
  # reparametrization have no kernel equivalent; omitted.
  print("KERNEL_OK")
</pallas_src>

<mosaic_0001>
module attributes {stable_mosaic.version = 11 : i64} {
  func.func @graph_layer_kernel(%arg0: i32, %arg1: memref<32x32xbf16, #tpu.memory_space<vmem>>, %arg2: memref<2x16x16xbf16, #tpu.memory_space<vmem>>, %arg3: memref<2x16x16xbf16, #tpu.memory_space<vmem>>, %arg4: memref<32x96xbf16, #tpu.memory_space<vmem>>, %arg5: memref<1x96xf32, #tpu.memory_space<vmem>>, %arg6: memref<32x32xbf16, #tpu.memory_space<vmem>>, %arg7: memref<1x32xf32, #tpu.memory_space<vmem>>, %arg8: memref<1x32xf32, #tpu.memory_space<vmem>>, %arg9: memref<1x32xf32, #tpu.memory_space<vmem>>, %arg10: memref<1x32xf32, #tpu.memory_space<vmem>>, %arg11: memref<32x64xbf16, #tpu.memory_space<vmem>>, %arg12: memref<1x64xf32, #tpu.memory_space<vmem>>, %arg13: memref<64x32xbf16, #tpu.memory_space<vmem>>, %arg14: memref<1x32xf32, #tpu.memory_space<vmem>>, %arg15: memref<32x32xf32, #tpu.memory_space<vmem>>, %arg16: memref<32x96xf32, #tpu.memory_space<vmem>>, %arg17: memref<32x32xf32, #tpu.memory_space<vmem>>) attributes {dimension_semantics = [#tpu.dimension_semantics<parallel>], iteration_bounds = array<i64: 2>, scalar_prefetch = 0 : i64, scratch_operands = 2 : i64, tpu.core_type = #tpu.core_type<tc>, window_params = [{transform_indices = @transform_0, window_bounds = array<i64: 32, 32>}, {transform_indices = @transform_1, window_bounds = array<i64: 2, 16, 16>}, {transform_indices = @transform_2, window_bounds = array<i64: 2, 16, 16>}, {pipeline_mode = #tpu.pipeline_mode<synchronous>, transform_indices = @transform_3, window_bounds = array<i64: 32, 96>}, {pipeline_mode = #tpu.pipeline_mode<synchronous>, transform_indices = @transform_4, window_bounds = array<i64: 1, 96>}, {pipeline_mode = #tpu.pipeline_mode<synchronous>, transform_indices = @transform_5, window_bounds = array<i64: 32, 32>}, {pipeline_mode = #tpu.pipeline_mode<synchronous>, transform_indices = @transform_6, window_bounds = array<i64: 1, 32>}, {pipeline_mode = #tpu.pipeline_mode<synchronous>, transform_indices = @transform_7, window_bounds = array<i64: 1, 32>}, {pipeline_mode = #tpu.pipeline_mode<synchronous>, transform_indices = @transform_8, window_bounds = array<i64: 1, 32>}, {pipeline_mode = #tpu.pipeline_mode<synchronous>, transform_indices = @transform_9, window_bounds = array<i64: 1, 32>}, {pipeline_mode = #tpu.pipeline_mode<synchronous>, transform_indices = @transform_10, window_bounds = array<i64: 32, 64>}, {pipeline_mode = #tpu.pipeline_mode<synchronous>, transform_indices = @transform_11, window_bounds = array<i64: 1, 64>}, {pipeline_mode = #tpu.pipeline_mode<synchronous>, transform_indices = @transform_12, window_bounds = array<i64: 64, 32>}, {pipeline_mode = #tpu.pipeline_mode<synchronous>, transform_indices = @transform_13, window_bounds = array<i64: 1, 32>}, {transform_indices = @transform_14, window_bounds = array<i64: 32, 32>}]} {
    %c0 = arith.constant 0 : index
    %c0_0 = arith.constant 0 : index
    %0 = vector.load %arg1[%c0, %c0_0] : memref<32x32xbf16, #tpu.memory_space<vmem>>, vector<32x32xbf16>
    %1 = arith.extf %0 : vector<32x32xbf16> to vector<32x32xf32>
    %cst = arith.constant dense<0.000000e+00> : vector<32xf32>
    %2 = vector.multi_reduction <add>, %1, %cst [1] : vector<32x32xf32> to vector<32xf32>
    %3 = vector.shape_cast %2 : vector<32xf32> to vector<32x1xf32>
    %cst_1 = arith.constant 3.200000e+01 : f32
    %4 = vector.broadcast %cst_1 : f32 to vector<32x1xf32>
    %5 = arith.divf %3, %4 : vector<32x1xf32>
    %6 = vector.broadcast %5 : vector<32x1xf32> to vector<32x32xf32>
    %7 = arith.subf %1, %6 : vector<32x32xf32>
    %8 = arith.mulf %7, %7 : vector<32x32xf32>
    %cst_2 = arith.constant dense<0.000000e+00> : vector<32xf32>
    %9 = vector.multi_reduction <add>, %8, %cst_2 [1] : vector<32x32xf32> to vector<32xf32>
    %10 = vector.shape_cast %9 : vector<32xf32> to vector<32x1xf32>
    %cst_3 = arith.constant 3.200000e+01 : f32
    %11 = vector.broadcast %cst_3 : f32 to vector<32x1xf32>
    %12 = arith.divf %10, %11 : vector<32x1xf32>
    %13 = vector.broadcast %5 : vector<32x1xf32> to vector<32x32xf32>
    %14 = arith.subf %1, %13 : vector<32x32xf32>
    %cst_4 = arith.constant 9.99999974E-6 : f32
    %15 = vector.broadcast %cst_4 : f32 to vector<32x1xf32>
    %16 = arith.addf %12, %15 : vector<32x1xf32>
    %17 = math.rsqrt %16 : vector<32x1xf32>
    %18 = vector.broadcast %17 : vector<32x1xf32> to vector<32x32xf32>
    %19 = arith.mulf %14, %18 : vector<32x32xf32>
    %c0_5 = arith.constant 0 : index
    %c0_6 = arith.constant 0 : index
    %20 = vector.load %arg7[%c0_5, %c0_6] : memref<1x32xf32, #tpu.memory_space<vmem>>, vector<1x32xf32>
    %21 = vector.broadcast %20 : vector<1x32xf32> to vector<32x32xf32>
    %22 = arith.mulf %19, %21 : vector<32x32xf32>
    %c0_7 = arith.constant 0 : index
    %c0_8 = arith.constant 0 : index
    %23 = vector.load %arg8[%c0_7, %c0_8] : memref<1x32xf32, #tpu.memory_space<vmem>>, vector<1x32xf32>
    %24 = vector.broadcast %23 : vector<1x32xf32> to vector<32x32xf32>
    %25 = arith.addf %22, %24 : vector<32x32xf32>
    %26 = arith.truncf %25 : vector<32x32xf32> to vector<32x32xbf16>
    %c0_9 = arith.constant 0 : index
    %c0_10 = arith.constant 0 : index
    %27 = vector.load %arg4[%c0_9, %c0_10] : memref<32x96xbf16, #tpu.memory_space<vmem>>, vector<32x96xbf16>
    %cst_11 = arith.constant dense<0.000000e+00> : vector<32x96xf32>
    %28 = tpu.matmul %26, %27, %cst_11 {dimension_numbers = #tpu.dot_dimension_numbers<[1], [0], [0], [1], [0, 0, 1, 1], [], []>} : vector<32x32xbf16>, vector<32x96xbf16>, vector<32x96xf32> -> vector<32x96xf32>
    %c0_12 = arith.constant 0 : index
    %c0_13 = arith.constant 0 : index
    %29 = vector.load %arg5[%c0_12, %c0_13] : memref<1x96xf32, #tpu.memory_space<vmem>>, vector<1x96xf32>
    %30 = vector.broadcast %29 : vector<1x96xf32> to vector<32x96xf32>
    %31 = arith.addf %28, %30 : vector<32x96xf32>
    %c0_14 = arith.constant 0 : index
    %c0_15 = arith.constant 0 : index
    %32 = vector.load %arg16[%c0_14, %c0_15] : memref<32x96xf32, #tpu.memory_space<vmem>>, vector<32x96xf32>
    tpu.vector_store %arg16[%c0_14, %c0_15], %31 {strides = array<i32>} : memref<32x96xf32, #tpu.memory_space<vmem>>, vector<32x96xf32>,
    %c0_i32 = arith.constant 0 : i32
    %c2_i32 = arith.constant 2 : i32
    %33 = arith.addi %c0_i32, %c2_i32 : i32
    %c1_i32 = arith.constant 1 : i32
    scf.for %arg18 = %c0_i32 to %33 step %c1_i32  : i32 {
      %c16_i32 = arith.constant 16 : i32
      %86 = arith.muli %arg18, %c16_i32 : i32
      %87 = tpu.assume_multiple %86, 16 : i32
      %88 = arith.index_cast %arg18 : i32 to index
      %c0_48 = arith.constant 0 : index
      %c0_49 = arith.constant 0 : index
      %89 = vector.load %arg2[%88, %c0_48, %c0_49] : memref<2x16x16xbf16, #tpu.memory_space<vmem>>, vector<1x16x16xbf16>
      %90 = vector.shape_cast %89 : vector<1x16x16xbf16> to vector<16x16xbf16>
      %91 = arith.extf %90 : vector<16x16xbf16> to vector<16x16xf32>
      %92 = arith.index_cast %arg18 : i32 to index
      %c0_50 = arith.constant 0 : index
      %c0_51 = arith.constant 0 : index
      %93 = vector.load %arg3[%92, %c0_50, %c0_51] : memref<2x16x16xbf16, #tpu.memory_space<vmem>>, vector<1x16x16xbf16>
      %94 = vector.shape_cast %93 : vector<1x16x16xbf16> to vector<16x16xbf16>
      %95 = arith.extf %94 : vector<16x16xbf16> to vector<16x16xf32>
      %96 = arith.index_cast %87 : i32 to index
      %c0_52 = arith.constant 0 : index
      %97 = vector.load %arg16[%96, %c0_52] : memref<32x96xf32, #tpu.memory_space<vmem>>, vector<16x96xf32>
      %98 = vector.extract_strided_slice %97 {offsets = [0, 0], sizes = [16, 8], strides = [1, 1]} : vector<16x96xf32> to vector<16x8xf32>
      %99 = vector.extract_strided_slice %97 {offsets = [0, 32], sizes = [16, 8], strides = [1, 1]} : vector<16x96xf32> to vector<16x8xf32>
      %100 = vector.extract_strided_slice %97 {offsets = [0, 64], sizes = [16, 8], strides = [1, 1]} : vector<16x96xf32> to vector<16x8xf32>
      %101 = arith.truncf %99 : vector<16x8xf32> to vector<16x8xbf16>
      %102 = arith.truncf %100 : vector<16x8xf32> to vector<16x8xbf16>
      %cst_53 = arith.constant dense<0.000000e+00> : vector<16x16xf32>
      %103 = tpu.matmul %101, %102, %cst_53 {dimension_numbers = #tpu.dot_dimension_numbers<[1], [1], [0], [0], [0, 0, 1, 0], [], []>} : vector<16x8xbf16>, vector<16x8xbf16>, vector<16x16xf32> -> vector<16x16xf32>
      %104 = arith.addf %103, %91 : vector<16x16xf32>
      %cst_54 = arith.constant dense<0xFF800000> : vector<16xf32>
      %105 = vector.multi_reduction <maximumf>, %104, %cst_54 [1] : vector<16x16xf32> to vector<16xf32>
      %106 = vector.shape_cast %105 : vector<16xf32> to vector<16x1xf32>
      %107 = vector.broadcast %106 : vector<16x1xf32> to vector<16x16xf32>
      %108 = arith.subf %104, %107 : vector<16x16xf32>
      %109 = math.exp %108 : vector<16x16xf32>
      %cst_55 = arith.constant dense<0.000000e+00> : vector<16xf32>
      %110 = vector.multi_reduction <add>, %109, %cst_55 [1] : vector<16x16xf32> to vector<16xf32>
      %111 = vector.shape_cast %110 : vector<16xf32> to vector<16x1xf32>
      %112 = tpu.reciprocal %111 {approx = true} : vector<16x1xf32> -> vector<16x1xf32>
      %113 = vector.broadcast %112 : vector<16x1xf32> to vector<16x16xf32>
      %114 = arith.mulf %109, %113 : vector<16x16xf32>
      %115 = arith.mulf %114, %95 : vector<16x16xf32>
      %116 = arith.truncf %115 : vector<16x16xf32> to vector<16x16xbf16>
      %117 = arith.truncf %98 : vector<16x8xf32> to vector<16x8xbf16>
      %cst_56 = arith.constant dense<0.000000e+00> : vector<16x8xf32>
      %118 = tpu.matmul %116, %117, %cst_56 {dimension_numbers = #tpu.dot_dimension_numbers<[1], [0], [0], [1], [0, 0, 1, 1], [], []>} : vector<16x16xbf16>, vector<16x8xbf16>, vector<16x8xf32> -> vector<16x8xf32>
      %119 = vector.extract_strided_slice %97 {offsets = [0, 8], sizes = [16, 8], strides = [1, 1]} : vector<16x96xf32> to vector<16x8xf32>
      %120 = vector.extract_strided_slice %97 {offsets = [0, 40], sizes = [16, 8], strides = [1, 1]} : vector<16x96xf32> to vector<16x8xf32>
      %121 = vector.extract_strided_slice %97 {offsets = [0, 72], sizes = [16, 8], strides = [1, 1]} : vector<16x96xf32> to vector<16x8xf32>
      %122 = arith.truncf %120 : vector<16x8xf32> to vector<16x8xbf16>
      %123 = arith.truncf %121 : vector<16x8xf32> to vector<16x8xbf16>
      %cst_57 = arith.constant dense<0.000000e+00> : vector<16x16xf32>
      %124 = tpu.matmul %122, %123, %cst_57 {dimension_numbers = #tpu.dot_dimension_numbers<[1], [1], [0], [0], [0, 0, 1, 0], [], []>} : vector<16x8xbf16>, vector<16x8xbf16>, vector<16x16xf32> -> vector<16x16xf32>
      %125 = arith.addf %124, %91 : vector<16x16xf32>
      %cst_58 = arith.constant dense<0xFF800000> : vector<16xf32>
      %126 = vector.multi_reduction <maximumf>, %125, %cst_58 [1] : vector<16x16xf32> to vector<16xf32>
      %127 = vector.shape_cast %126 : vector<16xf32> to vector<16x1xf32>
      %128 = vector.broadcast %127 : vector<16x1xf32> to vector<16x16xf32>
      %129 = arith.subf %125, %128 : vector<16x16xf32>
      %130 = math.exp %129 : vector<16x16xf32>
      %cst_59 = arith.constant dense<0.000000e+00> : vector<16xf32>
      %131 = vector.multi_reduction <add>, %130, %cst_59 [1] : vector<16x16xf32> to vector<16xf32>
      %132 = vector.shape_cast %131 : vector<16xf32> to vector<16x1xf32>
      %133 = tpu.reciprocal %132 {approx = true} : vector<16x1xf32> -> vector<16x1xf32>
      %134 = vector.broadcast %133 : vector<16x1xf32> to vector<16x16xf32>
      %135 = arith.mulf %130, %134 : vector<16x16xf32>
      %136 = arith.mulf %135, %95 : vector<16x16xf32>
      %137 = arith.truncf %136 : vector<16x16xf32> to vector<16x16xbf16>
      %138 = arith.truncf %119 : vector<16x8xf32> to vector<16x8xbf16>
      %cst_60 = arith.constant dense<0.000000e+00> : vector<16x8xf32>
      %139 = tpu.matmul %137, %138, %cst_60 {dimension_numbers = #tpu.dot_dimension_numbers<[1], [0], [0], [1], [0, 0, 1, 1], [], []>} : vector<16x16xbf16>, vector<16x8xbf16>, vector<16x8xf32> -> vector<16x8xf32>
      %140 = vector.extract_strided_slice %97 {offsets = [0, 16], sizes = [16, 8], strides = [1, 1]} : vector<16x96xf32> to vector<16x8xf32>
      %141 = vector.extract_strided_slice %97 {offsets = [0, 48], sizes = [16, 8], strides = [1, 1]} : vector<16x96xf32> to vector<16x8xf32>
      %142 = vector.extract_strided_slice %97 {offsets = [0, 80], sizes = [16, 8], strides = [1, 1]} : vector<16x96xf32> to vector<16x8xf32>
      %143 = arith.truncf %141 : vector<16x8xf32> to vector<16x8xbf16>
      %144 = arith.truncf %142 : vector<16x8xf32> to vector<16x8xbf16>
      %cst_61 = arith.constant dense<0.000000e+00> : vector<16x16xf32>
      %145 = tpu.matmul %143, %144, %cst_61 {dimension_numbers = #tpu.dot_dimension_numbers<[1], [1], [0], [0], [0, 0, 1, 0], [], []>} : vector<16x8xbf16>, vector<16x8xbf16>, vector<16x16xf32> -> vector<16x16xf32>
      %146 = arith.addf %145, %91 : vector<16x16xf32>
      %cst_62 = arith.constant dense<0xFF800000> : vector<16xf32>
      %147 = vector.multi_reduction <maximumf>, %146, %cst_62 [1] : vector<16x16xf32> to vector<16xf32>
      %148 = vector.shape_cast %147 : vector<16xf32> to vector<16x1xf32>
      %149 = vector.broadcast %148 : vector<16x1xf32> to vector<16x16xf32>
      %150 = arith.subf %146, %149 : vector<16x16xf32>
      %151 = math.exp %150 : vector<16x16xf32>
      %cst_63 = arith.constant dense<0.000000e+00> : vector<16xf32>
      %152 = vector.multi_reduction <add>, %151, %cst_63 [1] : vector<16x16xf32> to vector<16xf32>
      %153 = vector.shape_cast %152 : vector<16xf32> to vector<16x1xf32>
      %154 = tpu.reciprocal %153 {approx = true} : vector<16x1xf32> -> vector<16x1xf32>
      %155 = vector.broadcast %154 : vector<16x1xf32> to vector<16x16xf32>
      %156 = arith.mulf %151, %155 : vector<16x16xf32>
      %157 = arith.mulf %156, %95 : vector<16x16xf32>
      %158 = arith.truncf %157 : vector<16x16xf32> to vector<16x16xbf16>
      %159 = arith.truncf %140 : vector<16x8xf32> to vector<16x8xbf16>
      %cst_64 = arith.constant dense<0.000000e+00> : vector<16x8xf32>
      %160 = tpu.matmul %158, %159, %cst_64 {dimension_numbers = #tpu.dot_dimension_numbers<[1], [0], [0], [1], [0, 0, 1, 1], [], []>} : vector<16x16xbf16>, vector<16x8xbf16>, vector<16x8xf32> -> vector<16x8xf32>
      %161 = vector.extract_strided_slice %97 {offsets = [0, 24], sizes = [16, 8], strides = [1, 1]} : vector<16x96xf32> to vector<16x8xf32>
      %162 = vector.extract_strided_slice %97 {offsets = [0, 56], sizes = [16, 8], strides = [1, 1]} : vector<16x96xf32> to vector<16x8xf32>
      %163 = vector.extract_strided_slice %97 {offsets = [0, 88], sizes = [16, 8], strides = [1, 1]} : vector<16x96xf32> to vector<16x8xf32>
      %164 = arith.truncf %162 : vector<16x8xf32> to vector<16x8xbf16>
      %165 = arith.truncf %163 : vector<16x8xf32> to vector<16x8xbf16>
      %cst_65 = arith.constant dense<0.000000e+00> : vector<16x16xf32>
      %166 = tpu.matmul %164, %165, %cst_65 {dimension_numbers = #tpu.dot_dimension_numbers<[1], [1], [0], [0], [0, 0, 1, 0], [], []>} : vector<16x8xbf16>, vector<16x8xbf16>, vector<16x16xf32> -> vector<16x16xf32>
      %167 = arith.addf %166, %91 : vector<16x16xf32>
      %cst_66 = arith.constant dense<0xFF800000> : vector<16xf32>
      %168 = vector.multi_reduction <maximumf>, %167, %cst_66 [1] : vector<16x16xf32> to vector<16xf32>
      %169 = vector.shape_cast %168 : vector<16xf32> to vector<16x1xf32>
      %170 = vector.broadcast %169 : vector<16x1xf32> to vector<16x16xf32>
      %171 = arith.subf %167, %170 : vector<16x16xf32>
      %172 = math.exp %171 : vector<16x16xf32>
      %cst_67 = arith.constant dense<0.000000e+00> : vector<16xf32>
      %173 = vector.multi_reduction <add>, %172, %cst_67 [1] : vector<16x16xf32> to vector<16xf32>
      %174 = vector.shape_cast %173 : vector<16xf32> to vector<16x1xf32>
      %175 = tpu.reciprocal %174 {approx = true} : vector<16x1xf32> -> vector<16x1xf32>
      %176 = vector.broadcast %175 : vector<16x1xf32> to vector<16x16xf32>
      %177 = arith.mulf %172, %176 : vector<16x16xf32>
      %178 = arith.mulf %177, %95 : vector<16x16xf32>
      %179 = arith.truncf %178 : vector<16x16xf32> to vector<16x16xbf16>
      %180 = arith.truncf %161 : vector<16x8xf32> to vector<16x8xbf16>
      %cst_68 = arith.constant dense<0.000000e+00> : vector<16x8xf32>
      %181 = tpu.matmul %179, %180, %cst_68 {dimension_numbers = #tpu.dot_dimension_numbers<[1], [0], [0], [1], [0, 0, 1, 1], [], []>} : vector<16x16xbf16>, vector<16x8xbf16>, vector<16x8xf32> -> vector<16x8xf32>
      %182 = tpu.concatenate %118, %139, %160, %181 in 1 : vector<16x8xf32>, vector<16x8xf32>, vector<16x8xf32>, vector<16x8xf32> -> vector<16x32xf32>
      %183 = arith.index_cast %87 : i32 to index
      %c0_69 = arith.constant 0 : index
      %184 = vector.load %arg17[%183, %c0_69] : memref<32x32xf32, #tpu.memory_space<vmem>>, vector<16x32xf32>
      tpu.vector_store %arg17[%183, %c0_69], %182 {strides = array<i32>} : memref<32x32xf32, #tpu.memory_space<vmem>>, vector<16x32xf32>,
    }
    %c2_i32_16 = arith.constant 2 : i32
    %c0_17 = arith.constant 0 : index
    %c0_18 = arith.constant 0 : index
    %34 = vector.load %arg17[%c0_17, %c0_18] : memref<32x32xf32, #tpu.memory_space<vmem>>, vector<32x32xf32>
    %cst_19 = arith.constant 0.000000e+00 : f32
    %35 = vector.broadcast %cst_19 : f32 to vector<32x32xf32>
    %36 = arith.cmpf ogt, %34, %35 : vector<32x32xf32>
    %cst_20 = arith.constant 0.00999999977 : f32
    %37 = vector.broadcast %cst_20 : f32 to vector<32x32xf32>
    %38 = arith.mulf %37, %34 : vector<32x32xf32>
    %39 = arith.select %36, %34, %38 : vector<32x32xi1>, vector<32x32xf32>
    %40 = arith.truncf %39 : vector<32x32xf32> to vector<32x32xbf16>
    %c0_21 = arith.constant 0 : index
    %c0_22 = arith.constant 0 : index
    %41 = vector.load %arg6[%c0_21, %c0_22] : memref<32x32xbf16, #tpu.memory_space<vmem>>, vector<32x32xbf16>
    %cst_23 = arith.constant dense<0.000000e+00> : vector<32x32xf32>
    %42 = tpu.matmul %40, %41, %cst_23 {dimension_numbers = #tpu.dot_dimension_numbers<[1], [0], [0], [1], [0, 0, 1, 1], [], []>} : vector<32x32xbf16>, vector<32x32xbf16>, vector<32x32xf32> -> vector<32x32xf32>
    %c0_24 = arith.constant 0 : index
    %c0_25 = arith.constant 0 : index
    %43 = vector.load %arg1[%c0_24, %c0_25] : memref<32x32xbf16, #tpu.memory_space<vmem>>, vector<32x32xbf16>
    %44 = arith.extf %43 : vector<32x32xbf16> to vector<32x32xf32>
    %45 = arith.addf %42, %44 : vector<32x32xf32>
    %cst_26 = arith.constant dense<0.000000e+00> : vector<32xf32>
    %46 = vector.multi_reduction <add>, %45, %cst_26 [1] : vector<32x32xf32> to vector<32xf32>
    %47 = vector.shape_cast %46 : vector<32xf32> to vector<32x1xf32>
    %cst_27 = arith.constant 3.200000e+01 : f32
    %48 = vector.broadcast %cst_27 : f32 to vector<32x1xf32>
    %49 = arith.divf %47, %48 : vector<32x1xf32>
    %50 = vector.broadcast %49 : vector<32x1xf32> to vector<32x32xf32>
    %51 = arith.subf %45, %50 : vector<32x32xf32>
    %52 = arith.mulf %51, %51 : vector<32x32xf32>
    %cst_28 = arith.constant dense<0.000000e+00> : vector<32xf32>
    %53 = vector.multi_reduction <add>, %52, %cst_28 [1] : vector<32x32xf32> to vector<32xf32>
    %54 = vector.shape_cast %53 : vector<32xf32> to vector<32x1xf32>
    %cst_29 = arith.constant 3.200000e+01 : f32
    %55 = vector.broadcast %cst_29 : f32 to vector<32x1xf32>
    %56 = arith.divf %54, %55 : vector<32x1xf32>
    %57 = vector.broadcast %49 : vector<32x1xf32> to vector<32x32xf32>
    %58 = arith.subf %45, %57 : vector<32x32xf32>
    %cst_30 = arith.constant 9.99999974E-6 : f32
    %59 = vector.broadcast %cst_30 : f32 to vector<32x1xf32>
    %60 = arith.addf %56, %59 : vector<32x1xf32>
    %61 = math.rsqrt %60 : vector<32x1xf32>
    %62 = vector.broadcast %61 : vector<32x1xf32> to vector<32x32xf32>
    %63 = arith.mulf %58, %62 : vector<32x32xf32>
    %c0_31 = arith.constant 0 : index
    %c0_32 = arith.constant 0 : index
    %64 = vector.load %arg9[%c0_31, %c0_32] : memref<1x32xf32, #tpu.memory_space<vmem>>, vector<1x32xf32>
    %65 = vector.broadcast %64 : vector<1x32xf32> to vector<32x32xf32>
    %66 = arith.mulf %63, %65 : vector<32x32xf32>
    %c0_33 = arith.constant 0 : index
    %c0_34 = arith.constant 0 : index
    %67 = vector.load %arg10[%c0_33, %c0_34] : memref<1x32xf32, #tpu.memory_space<vmem>>, vector<1x32xf32>
    %68 = vector.broadcast %67 : vector<1x32xf32> to vector<32x32xf32>
    %69 = arith.addf %66, %68 : vector<32x32xf32>
    %70 = arith.truncf %69 : vector<32x32xf32> to vector<32x32xbf16>
    %c0_35 = arith.constant 0 : index
    %c0_36 = arith.constant 0 : index
    %71 = vector.load %arg11[%c0_35, %c0_36] : memref<32x64xbf16, #tpu.memory_space<vmem>>, vector<32x64xbf16>
    %cst_37 = arith.constant dense<0.000000e+00> : vector<32x64xf32>
    %72 = tpu.matmul %70, %71, %cst_37 {dimension_numbers = #tpu.dot_dimension_numbers<[1], [0], [0], [1], [0, 0, 1, 1], [], []>} : vector<32x32xbf16>, vector<32x64xbf16>, vector<32x64xf32> -> vector<32x64xf32>
    %c0_38 = arith.constant 0 : index
    %c0_39 = arith.constant 0 : index
    %73 = vector.load %arg12[%c0_38, %c0_39] : memref<1x64xf32, #tpu.memory_space<vmem>>, vector<1x64xf32>
    %74 = vector.broadcast %73 : vector<1x64xf32> to vector<32x64xf32>
    %75 = arith.addf %72, %74 : vector<32x64xf32>
    %cst_40 = arith.constant 0.000000e+00 : f32
    %76 = vector.broadcast %cst_40 : f32 to vector<32x64xf32>
    %77 = arith.maximumf %75, %76 : vector<32x64xf32>
    %78 = arith.truncf %77 : vector<32x64xf32> to vector<32x64xbf16>
    %c0_41 = arith.constant 0 : index
    %c0_42 = arith.constant 0 : index
    %79 = vector.load %arg13[%c0_41, %c0_42] : memref<64x32xbf16, #tpu.memory_space<vmem>>, vector<64x32xbf16>
    %cst_43 = arith.constant dense<0.000000e+00> : vector<32x32xf32>
    %80 = tpu.matmul %78, %79, %cst_43 {dimension_numbers = #tpu.dot_dimension_numbers<[1], [0], [0], [1], [0, 0, 1, 1], [], []>} : vector<32x64xbf16>, vector<64x32xbf16>, vector<32x32xf32> -> vector<32x32xf32>
    %c0_44 = arith.constant 0 : index
    %c0_45 = arith.constant 0 : index
    %81 = vector.load %arg14[%c0_44, %c0_45] : memref<1x32xf32, #tpu.memory_space<vmem>>, vector<1x32xf32>
    %82 = vector.broadcast %81 : vector<1x32xf32> to vector<32x32xf32>
    %83 = arith.addf %80, %82 : vector<32x32xf32>
    %84 = arith.addf %83, %45 : vector<32x32xf32>
    %c0_46 = arith.constant 0 : index
    %c0_47 = arith.constant 0 : index
    %85 = vector.load %arg15[%c0_46, %c0_47] : memref<32x32xf32, #tpu.memory_space<vmem>>, vector<32x32xf32>
    tpu.vector_store %arg15[%c0_46, %c0_47], %84 {strides = array<i32>} : memref<32x32xf32, #tpu.memory_space<vmem>>, vector<32x32xf32>,
    return
  }
  func.func @transform_0(%arg0: i32) -> (i32, i32) {
    %c0_i32 = arith.constant 0 : i32
    %c0_i32_0 = arith.constant 0 : i32
    return %arg0, %c0_i32 : i32, i32
  }
  func.func @transform_1(%arg0: i32) -> (i32, i32, i32) {
    %c0_i32 = arith.constant 0 : i32
    %c0_i32_0 = arith.constant 0 : i32
    %c0_i32_1 = arith.constant 0 : i32
    return %arg0, %c0_i32, %c0_i32_0 : i32, i32, i32
  }
  func.func @transform_2(%arg0: i32) -> (i32, i32, i32) {
    %c0_i32 = arith.constant 0 : i32
    %c0_i32_0 = arith.constant 0 : i32
    %c0_i32_1 = arith.constant 0 : i32
    return %arg0, %c0_i32, %c0_i32_0 : i32, i32, i32
  }
  func.func @transform_3(%arg0: i32) -> (i32, i32) {
    %c0_i32 = arith.constant 0 : i32
    %c0_i32_0 = arith.constant 0 : i32
    %c0_i32_1 = arith.constant 0 : i32
    return %c0_i32, %c0_i32_0 : i32, i32
  }
  func.func @transform_4(%arg0: i32) -> (i32, i32) {
    %c0_i32 = arith.constant 0 : i32
    %c0_i32_0 = arith.constant 0 : i32
    %c0_i32_1 = arith.constant 0 : i32
    return %c0_i32, %c0_i32_0 : i32, i32
  }
  func.func @transform_5(%arg0: i32) -> (i32, i32) {
    %c0_i32 = arith.constant 0 : i32
    %c0_i32_0 = arith.constant 0 : i32
    %c0_i32_1 = arith.constant 0 : i32
    return %c0_i32, %c0_i32_0 : i32, i32
  }
  func.func @transform_6(%arg0: i32) -> (i32, i32) {
    %c0_i32 = arith.constant 0 : i32
    %c0_i32_0 = arith.constant 0 : i32
    %c0_i32_1 = arith.constant 0 : i32
    return %c0_i32, %c0_i32_0 : i32, i32
  }
  func.func @transform_7(%arg0: i32) -> (i32, i32) {
    %c0_i32 = arith.constant 0 : i32
    %c0_i32_0 = arith.constant 0 : i32
    %c0_i32_1 = arith.constant 0 : i32
    return %c0_i32, %c0_i32_0 : i32, i32
  }
  func.func @transform_8(%arg0: i32) -> (i32, i32) {
    %c0_i32 = arith.constant 0 : i32
    %c0_i32_0 = arith.constant 0 : i32
    %c0_i32_1 = arith.constant 0 : i32
    return %c0_i32, %c0_i32_0 : i32, i32
  }
  func.func @transform_9(%arg0: i32) -> (i32, i32) {
    %c0_i32 = arith.constant 0 : i32
    %c0_i32_0 = arith.constant 0 : i32
    %c0_i32_1 = arith.constant 0 : i32
    return %c0_i32, %c0_i32_0 : i32, i32
  }
  func.func @transform_10(%arg0: i32) -> (i32, i32) {
    %c0_i32 = arith.constant 0 : i32
    %c0_i32_0 = arith.constant 0 : i32
    %c0_i32_1 = arith.constant 0 : i32
    return %c0_i32, %c0_i32_0 : i32, i32
  }
  func.func @transform_11(%arg0: i32) -> (i32, i32) {
    %c0_i32 = arith.constant 0 : i32
    %c0_i32_0 = arith.constant 0 : i32
    %c0_i32_1 = arith.constant 0 : i32
    return %c0_i32, %c0_i32_0 : i32, i32
  }
  func.func @transform_12(%arg0: i32) -> (i32, i32) {
    %c0_i32 = arith.constant 0 : i32
    %c0_i32_0 = arith.constant 0 : i32
    %c0_i32_1 = arith.constant 0 : i32
    return %c0_i32, %c0_i32_0 : i32, i32
  }
  func.func @transform_13(%arg0: i32) -> (i32, i32) {
    %c0_i32 = arith.constant 0 : i32
    %c0_i32_0 = arith.constant 0 : i32
    %c0_i32_1 = arith.constant 0 : i32
    return %c0_i32, %c0_i32_0 : i32, i32
  }
  func.func @transform_14(%arg0: i32) -> (i32, i32) {
    %c0_i32 = arith.constant 0 : i32
    %c0_i32_0 = arith.constant 0 : i32
    return %arg0, %c0_i32 : i32, i32
  }
}

</mosaic_0001>

<llo_original>
// kernel: tpu_custom_call.1
$region0: #{tpu_custom_call.1}
  #allocation0 [shape = 'u32[]', space=smem, size = 0x4, offset = 0x4, fixed_abs, tag = 'smem constant byte address 0x4 - core index']
  #allocation1 [shape = 'u32[144,128]{1,0:T(1,128)}', space=vmem, size = 0x12000, scoped, tag = 'internal scratch']
  #allocation2 [shape = 'f32[32,96]{1,0:T(8,128)}', space=vmem, size = 0x4000, scoped, tag = 'scratch operand']
  #allocation3 [shape = 'f32[32,32]{1,0:T(8,128)}', space=vmem, size = 0x4000, scoped, tag = 'scratch operand']
  %s0 = inlined_call_operand.vmem [shape: bf16[64,32], index: 0, kind: input, shape index: {}]
  %s1 = inlined_call_operand.vmem [shape: bf16[4,16,16], index: 1, kind: input, shape index: {}]
  %s2 = inlined_call_operand.vmem [shape: bf16[4,16,16], index: 2, kind: input, shape index: {}]
  %s3 = inlined_call_operand.vmem [shape: bf16[32,96], index: 3, kind: input, shape index: {}]
  %s4 = inlined_call_operand.vmem [shape: f32[1,96], index: 4, kind: input, shape index: {}]
  %s5 = inlined_call_operand.vmem [shape: bf16[32,32], index: 5, kind: input, shape index: {}]
  %s6 = inlined_call_operand.vmem [shape: f32[1,32], index: 6, kind: input, shape index: {}]
  %s7 = inlined_call_operand.hbm [shape: f32[1,32], index: 7, kind: input, shape index: {}]
  %s8 = inlined_call_operand.hbm [shape: f32[1,32], index: 8, kind: input, shape index: {}]
  %s9 = inlined_call_operand.hbm [shape: f32[1,32], index: 9, kind: input, shape index: {}]
  %s10 = inlined_call_operand.vmem [shape: bf16[32,64], index: 10, kind: input, shape index: {}]
  %s11 = inlined_call_operand.vmem [shape: f32[1,64], index: 11, kind: input, shape index: {}]
  %s12 = inlined_call_operand.vmem [shape: bf16[64,32], index: 12, kind: input, shape index: {}]
  %s13 = inlined_call_operand.vmem [shape: f32[1,32], index: 13, kind: input, shape index: {}]
  %s14 = inlined_call_operand.vmem [shape: f32[64,32], index: 14, kind: output, shape index: {}]
  %s15 = sld [smem:[#allocation0]]
  $region108: #{tpu_custom_call.1} parent=0
    _
  %s17 = ssub.s32 1, %s15
  %s18 = scalar_select 0, %s17, %s15
  $region1: #{tpu_custom_call.1} parent=0
    #allocation4 [shape = 'u8[512]{0}', space=vmem, size = 0x400, scoped, tag = 'input window, operand 7, single buffered']
    #allocation5 [shape = 's32[2]{0}', space=sflag, size = 0x8, scoped, tag = 'scoped memory for tpu_custom_call.1']
    #allocation6 [shape = 'u8[512]{0}', space=vmem, size = 0x400, scoped, tag = 'input window, operand 8, single buffered']
    #allocation7 [shape = 's32[1]{0}', space=sflag, size = 0x4, scoped, tag = 'scoped memory for tpu_custom_call.1']
    #allocation8 [shape = 'u8[512]{0}', space=vmem, size = 0x400, scoped, tag = 'input window, operand 9, single buffered']
    %19 = vsyncpa [#allocation5], 0
    %20 = vsyncpa [#allocation7], 0
    loop: start=0, step=1, limit=4
    $region2: #{tpu_custom_call.1} parent=1 // loop_pre_header
      _
    $region3: #{tpu_custom_call.1} parent=1 // loop_header
      %s22 = sphi 0, %s26
      %p23 = scmp.ge.s32.totalorder %s22, 4
      %s32 = sphi 0, %s34
      %s35 = sphi 0, %s32
      %s36 = sphi 0, %s35
      %s52 = sphi 0, %s36
      %s58 = sphi 0, %s60
      %s61 = sphi 0, %s58
      %s62 = sphi 0, %s61
      %s78 = sphi 0, %s62
      %s84 = sphi 0, %s86
      %s87 = sphi 0, %s84
      %s88 = sphi 0, %s87
      %s104 = sphi 0, %s88
      %s108 = sphi 0, %s108
      %s110 = sphi 0, %s108
      %s111 = sphi 0, %s110
      %s125 = sphi 0, %s111
      %s129 = sphi 0, %s129
      %s131 = sphi 0, %s129
      %s132 = sphi 0, %s131
      %s146 = sphi 0, %s132
      %s150 = sphi 0, %s150
      %s152 = sphi 0, %s150
      %s153 = sphi 0, %s152
      %s167 = sphi 0, %s153
      %s171 = sphi 0, %s171
      %s173 = sphi 0, %s171
      %s174 = sphi 0, %s173
      %s188 = sphi 0, %s174
      %s192 = sphi 0, %s192
      %s194 = sphi 0, %s192
      %s195 = sphi 0, %s194
      %s209 = sphi 0, %s195
      %s213 = sphi 0, %s213
      %s215 = sphi 0, %s213
      %s216 = sphi 0, %s215
      %s230 = sphi 0, %s216
      %s234 = sphi 0, %s234
      %s236 = sphi 0, %s234
      %s237 = sphi 0, %s236
      %s251 = sphi 0, %s237
      %s255 = sphi 0, %s255
      %s257 = sphi 0, %s255
      %s258 = sphi 0, %s257
      %s272 = sphi 0, %s258
      %s276 = sphi 0, %s276
      %s278 = sphi 0, %s276
      %s279 = sphi 0, %s278
      %s293 = sphi 0, %s279
      %s297 = sphi 0, %s297
      %s299 = sphi 0, %s297
      %s300 = sphi 0, %s299
      %s314 = sphi 0, %s300
      %s318 = sphi 0, %s318
      %s320 = sphi 0, %s318
      %s321 = sphi 0, %s320
      %s335 = sphi 0, %s321
      %s341 = sphi 0, %s343
      %s344 = sphi 0, %s341
      %s345 = sphi 0, %s344
      %s361 = sphi 0, %s345
    $region4: #{tpu_custom_call.1} parent=1 // loop_header_branch
      %25 = sbr.rel (%p23) target = $region8
    $region5: #{tpu_custom_call.1} parent=1 // loop_body
      %s27 = ssub.s32 %s22, 1
      %s28 = ssub.s32 %s22, 2
      %s29 = sadd.s32 %s22, 1
      %s30 = ssub.s32 %s22, %s29
      %p31 = scmp.eq.s32.totalorder %s30, 0
      %s33 = sadd.s32 %s32, 1
      %s34 = scalar_select %p31, %s32, %s33
      %p37 = pneg %p31
      %p38 = scmp.eq.s32.totalorder %s22, 1
      %p39 = por %p37, %p38
      %p40 = scmp.ne.s32.totalorder %s32, %s35
      %p41 = scmp.eq.s32.totalorder %s22, 0
      %p42 = por %p40, %p41
      %p43 = scmp.ne.s32.totalorder %s32, %s35
      %p44 = scmp.eq.s32.totalorder %s27, 1
      %p45 = por %p43, %p44
      %p46 = scmp.ne.s32.totalorder %s35, %s36
      %p47 = scmp.eq.s32.totalorder %s27, 0
      %p48 = por %p46, %p47
      %p49 = scmp.ne.s32.totalorder %s35, %s36
      %p50 = scmp.eq.s32.totalorder %s28, 1
      %p51 = por %p49, %p50
      %p53 = scmp.ne.s32.totalorder %s36, %s52
      %p54 = scmp.eq.s32.totalorder %s28, 0
      %p55 = por %p53, %p54
      %s56 = ssub.s32 %s22, %s29
      %p57 = scmp.eq.s32.totalorder %s56, 0
      %s59 = sadd.s32 %s58, 1
      %s60 = scalar_select %p57, %s58, %s59
      %p63 = pneg %p57
      %p64 = scmp.eq.s32.totalorder %s22, 1
      %p65 = por %p63, %p64
      %p66 = scmp.ne.s32.totalorder %s58, %s61
      %p67 = scmp.eq.s32.totalorder %s22, 0
      %p68 = por %p66, %p67
      %p69 = scmp.ne.s32.totalorder %s58, %s61
      %p70 = scmp.eq.s32.totalorder %s27, 1
      %p71 = por %p69, %p70
      %p72 = scmp.ne.s32.totalorder %s61, %s62
      %p73 = scmp.eq.s32.totalorder %s27, 0
      %p74 = por %p72, %p73
      %p75 = scmp.ne.s32.totalorder %s61, %s62
      %p76 = scmp.eq.s32.totalorder %s28, 1
      %p77 = por %p75, %p76
      %p79 = scmp.ne.s32.totalorder %s62, %s78
      %p80 = scmp.eq.s32.totalorder %s28, 0
      %p81 = por %p79, %p80
      %s82 = ssub.s32 %s22, %s29
      %p83 = scmp.eq.s32.totalorder %s82, 0
      %s85 = sadd.s32 %s84, 1
      %s86 = scalar_select %p83, %s84, %s85
      %p89 = pneg %p83
      %p90 = scmp.eq.s32.totalorder %s22, 1
      %p91 = por %p89, %p90
      %p92 = scmp.ne.s32.totalorder %s84, %s87
      %p93 = scmp.eq.s32.totalorder %s22, 0
      %p94 = por %p92, %p93
      %p95 = scmp.ne.s32.totalorder %s84, %s87
      %p96 = scmp.eq.s32.totalorder %s27, 1
      %p97 = por %p95, %p96
      %p98 = scmp.ne.s32.totalorder %s87, %s88
      %p99 = scmp.eq.s32.totalorder %s27, 0
      %p100 = por %p98, %p99
      %p101 = scmp.ne.s32.totalorder %s87, %s88
      %p102 = scmp.eq.s32.totalorder %s28, 1
      %p103 = por %p101, %p102
      %p105 = scmp.ne.s32.totalorder %s88, %s104
      %p106 = scmp.eq.s32.totalorder %s28, 0
      %p107 = por %p105, %p106
      %s109 = sadd.s32 %s108, 1
      %p112 = scmp.eq.s32.totalorder %s22, 1
      %p113 = scmp.ne.s32.totalorder %s108, %s110
      %p114 = scmp.eq.s32.totalorder %s22, 0
      %p115 = por %p113, %p114
      %p116 = scmp.ne.s32.totalorder %s108, %s110
      %p117 = scmp.eq.s32.totalorder %s27, 1
      %p118 = por %p116, %p117
      %p119 = scmp.ne.s32.totalorder %s110, %s111
      %p120 = scmp.eq.s32.totalorder %s27, 0
      %p121 = por %p119, %p120
      %p122 = scmp.ne.s32.totalorder %s110, %s111
      %p123 = scmp.eq.s32.totalorder %s28, 1
      %p124 = por %p122, %p123
      %p126 = scmp.ne.s32.totalorder %s111, %s125
      %p127 = scmp.eq.s32.totalorder %s28, 0
      %p128 = por %p126, %p127
      %s130 = sadd.s32 %s129, 1
      %p133 = scmp.eq.s32.totalorder %s22, 1
      %p134 = scmp.ne.s32.totalorder %s129, %s131
      %p135 = scmp.eq.s32.totalorder %s22, 0
      %p136 = por %p134, %p135
      %p137 = scmp.ne.s32.totalorder %s129, %s131
      %p138 = scmp.eq.s32.totalorder %s27, 1
      %p139 = por %p137, %p138
      %p140 = scmp.ne.s32.totalorder %s131, %s132
      %p141 = scmp.eq.s32.totalorder %s27, 0
      %p142 = por %p140, %p141
      %p143 = scmp.ne.s32.totalorder %s131, %s132
      %p144 = scmp.eq.s32.totalorder %s28, 1
      %p145 = por %p143, %p144
      %p147 = scmp.ne.s32.totalorder %s132, %s146
      %p148 = scmp.eq.s32.totalorder %s28, 0
      %p149 = por %p147, %p148
      %s151 = sadd.s32 %s150, 1
      %p154 = scmp.eq.s32.totalorder %s22, 1
      %p155 = scmp.ne.s32.totalorder %s150, %s152
      %p156 = scmp.eq.s32.totalorder %s22, 0
      %p157 = por %p155, %p156
      %p158 = scmp.ne.s32.totalorder %s150, %s152
      %p159 = scmp.eq.s32.totalorder %s27, 1
      %p160 = por %p158, %p159
      %p161 = scmp.ne.s32.totalorder %s152, %s153
      %p162 = scmp.eq.s32.totalorder %s27, 0
      %p163 = por %p161, %p162
      %p164 = scmp.ne.s32.totalorder %s152, %s153
      %p165 = scmp.eq.s32.totalorder %s28, 1
      %p166 = por %p164, %p165
      %p168 = scmp.ne.s32.totalorder %s153, %s167
      %p169 = scmp.eq.s32.totalorder %s28, 0
      %p170 = por %p168, %p169
      %s172 = sadd.s32 %s171, 1
      %p175 = scmp.eq.s32.totalorder %s22, 1
      %p176 = scmp.ne.s32.totalorder %s171, %s173
      %p177 = scmp.eq.s32.totalorder %s22, 0
      %p178 = por %p176, %p177
      %p179 = scmp.ne.s32.totalorder %s171, %s173
      %p180 = scmp.eq.s32.totalorder %s27, 1
      %p181 = por %p179, %p180
      %p182 = scmp.ne.s32.totalorder %s173, %s174
      %p183 = scmp.eq.s32.totalorder %s27, 0
      %p184 = por %p182, %p183
      %p185 = scmp.ne.s32.totalorder %s173, %s174
      %p186 = scmp.eq.s32.totalorder %s28, 1
      %p187 = por %p185, %p186
      %p189 = scmp.ne.s32.totalorder %s174, %s188
      %p190 = scmp.eq.s32.totalorder %s28, 0
      %p191 = por %p189, %p190
      %s193 = sadd.s32 %s192, 1
      %p196 = scmp.eq.s32.totalorder %s22, 1
      %p197 = scmp.ne.s32.totalorder %s192, %s194
      %p198 = scmp.eq.s32.totalorder %s22, 0
      %p199 = por %p197, %p198
      %p200 = scmp.ne.s32.totalorder %s192, %s194
      %p201 = scmp.eq.s32.totalorder %s27, 1
      %p202 = por %p200, %p201
      %p203 = scmp.ne.s32.totalorder %s194, %s195
      %p204 = scmp.eq.s32.totalorder %s27, 0
      %p205 = por %p203, %p204
      %p206 = scmp.ne.s32.totalorder %s194, %s195
      %p207 = scmp.eq.s32.totalorder %s28, 1
      %p208 = por %p206, %p207
      %p210 = scmp.ne.s32.totalorder %s195, %s209
      %p211 = scmp.eq.s32.totalorder %s28, 0
      %p212 = por %p210, %p211
      %s214 = sadd.s32 %s213, 1
      %p217 = scmp.eq.s32.totalorder %s22, 1
      %p218 = scmp.ne.s32.totalorder %s213, %s215
      %p219 = scmp.eq.s32.totalorder %s22, 0
      %p220 = por %p218, %p219
      %p221 = scmp.ne.s32.totalorder %s213, %s215
      %p222 = scmp.eq.s32.totalorder %s27, 1
      %p223 = por %p221, %p222
      %p224 = scmp.ne.s32.totalorder %s215, %s216
      %p225 = scmp.eq.s32.totalorder %s27, 0
      %p226 = por %p224, %p225
      %p227 = scmp.ne.s32.totalorder %s215, %s216
      %p228 = scmp.eq.s32.totalorder %s28, 1
      %p229 = por %p227, %p228
      %p231 = scmp.ne.s32.totalorder %s216, %s230
      %p232 = scmp.eq.s32.totalorder %s28, 0
      %p233 = por %p231, %p232
      %s235 = sadd.s32 %s234, 1
      %p238 = scmp.eq.s32.totalorder %s22, 1
      %p239 = scmp.ne.s32.totalorder %s234, %s236
      %p240 = scmp.eq.s32.totalorder %s22, 0
      %p241 = por %p239, %p240
      %p242 = scmp.ne.s32.totalorder %s234, %s236
      %p243 = scmp.eq.s32.totalorder %s27, 1
      %p244 = por %p242, %p243
      %p245 = scmp.ne.s32.totalorder %s236, %s237
      %p246 = scmp.eq.s32.totalorder %s27, 0
      %p247 = por %p245, %p246
      %p248 = scmp.ne.s32.totalorder %s236, %s237
      %p249 = scmp.eq.s32.totalorder %s28, 1
      %p250 = por %p248, %p249
      %p252 = scmp.ne.s32.totalorder %s237, %s251
      %p253 = scmp.eq.s32.totalorder %s28, 0
      %p254 = por %p252, %p253
      %s256 = sadd.s32 %s255, 1
      %p259 = scmp.eq.s32.totalorder %s22, 1
      %p260 = scmp.ne.s32.totalorder %s255, %s257
      %p261 = scmp.eq.s32.totalorder %s22, 0
      %p262 = por %p260, %p261
      %p263 = scmp.ne.s32.totalorder %s255, %s257
      %p264 = scmp.eq.s32.totalorder %s27, 1
      %p265 = por %p263, %p264
      %p266 = scmp.ne.s32.totalorder %s257, %s258
      %p267 = scmp.eq.s32.totalorder %s27, 0
      %p268 = por %p266, %p267
      %p269 = scmp.ne.s32.totalorder %s257, %s258
      %p270 = scmp.eq.s32.totalorder %s28, 1
      %p271 = por %p269, %p270
      %p273 = scmp.ne.s32.totalorder %s258, %s272
      %p274 = scmp.eq.s32.totalorder %s28, 0
      %p275 = por %p273, %p274
      %s277 = sadd.s32 %s276, 1
      %p280 = scmp.eq.s32.totalorder %s22, 1
      %p281 = scmp.ne.s32.totalorder %s276, %s278
      %p282 = scmp.eq.s32.totalorder %s22, 0
      %p283 = por %p281, %p282
      %p284 = scmp.ne.s32.totalorder %s276, %s278
      %p285 = scmp.eq.s32.totalorder %s27, 1
      %p286 = por %p284, %p285
      %p287 = scmp.ne.s32.totalorder %s278, %s279
      %p288 = scmp.eq.s32.totalorder %s27, 0
      %p289 = por %p287, %p288
      %p290 = scmp.ne.s32.totalorder %s278, %s279
      %p291 = scmp.eq.s32.totalorder %s28, 1
      %p292 = por %p290, %p291
      %p294 = scmp.ne.s32.totalorder %s279, %s293
      %p295 = scmp.eq.s32.totalorder %s28, 0
      %p296 = por %p294, %p295
      %s298 = sadd.s32 %s297, 1
      %p301 = scmp.eq.s32.totalorder %s22, 1
      %p302 = scmp.ne.s32.totalorder %s297, %s299
      %p303 = scmp.eq.s32.totalorder %s22, 0
      %p304 = por %p302, %p303
      %p305 = scmp.ne.s32.totalorder %s297, %s299
      %p306 = scmp.eq.s32.totalorder %s27, 1
      %p307 = por %p305, %p306
      %p308 = scmp.ne.s32.totalorder %s299, %s300
      %p309 = scmp.eq.s32.totalorder %s27, 0
      %p310 = por %p308, %p309
      %p311 = scmp.ne.s32.totalorder %s299, %s300
      %p312 = scmp.eq.s32.totalorder %s28, 1
      %p313 = por %p311, %p312
      %p315 = scmp.ne.s32.totalorder %s300, %s314
      %p316 = scmp.eq.s32.totalorder %s28, 0
      %p317 = por %p315, %p316
      %s319 = sadd.s32 %s318, 1
      %p322 = scmp.eq.s32.totalorder %s22, 1
      %p323 = scmp.ne.s32.totalorder %s318, %s320
      %p324 = scmp.eq.s32.totalorder %s22, 0
      %p325 = por %p323, %p324
      %p326 = scmp.ne.s32.totalorder %s318, %s320
      %p327 = scmp.eq.s32.totalorder %s27, 1
      %p328 = por %p326, %p327
      %p329 = scmp.ne.s32.totalorder %s320, %s321
      %p330 = scmp.eq.s32.totalorder %s27, 0
      %p331 = por %p329, %p330
      %p332 = scmp.ne.s32.totalorder %s320, %s321
      %p333 = scmp.eq.s32.totalorder %s28, 1
      %p334 = por %p332, %p333
      %p336 = scmp.ne.s32.totalorder %s321, %s335
      %p337 = scmp.eq.s32.totalorder %s28, 0
      %p338 = por %p336, %p337
      %s339 = ssub.s32 %s22, %s29
      %p340 = scmp.eq.s32.totalorder %s339, 0
      %s342 = sadd.s32 %s341, 1
      %s343 = scalar_select %p340, %s341, %s342
      %p346 = pneg %p340
      %p347 = scmp.eq.s32.totalorder %s22, 1
      %p348 = por %p346, %p347
      %p349 = scmp.ne.s32.totalorder %s341, %s344
      %p350 = scmp.eq.s32.totalorder %s22, 0
      %p351 = por %p349, %p350
      %p352 = scmp.ne.s32.totalorder %s341, %s344
      %p353 = scmp.eq.s32.totalorder %s27, 1
      %p354 = por %p352, %p353
      %p355 = scmp.ne.s32.totalorder %s344, %s345
      %p356 = scmp.eq.s32.totalorder %s27, 0
      %p357 = por %p355, %p356
      %p358 = scmp.ne.s32.totalorder %s344, %s345
      %p359 = scmp.eq.s32.totalorder %s28, 1
      %p360 = por %p358, %p359
      %p362 = scmp.ne.s32.totalorder %s345, %s361
      %p363 = scmp.eq.s32.totalorder %s28, 0
      %p364 = por %p362, %p363
      %p365 = scmp.le.s32.totalorder 1, %s22
      %p366 = scmp.lt.s32.totalorder %s22, 3
      %p367 = pnand %p365, %p366
      %p368 = pneg %p367
      // Predicated region
      $region9: #{tpu_custom_call.1} parent=5 // pred_check
        _
      $region10: #{tpu_custom_call.1} parent=5 // pred_check_branch
        %370 = sbr.rel (%p367) target = $region12
      $region11: #{tpu_custom_call.1} parent=5 // pred_region
        %s371 = ssub.s32 %s22, 1
        // Predicated region
        $region13: #{tpu_custom_call.1} parent=11 // pred_check
          %p372 = pneg %p121
        $region14: #{tpu_custom_call.1} parent=11 // pred_check_branch
          %374 = sbr.rel (%p372) target = $region16
        $region15: #{tpu_custom_call.1} parent=11 // pred_region
          _
        $region16: #{tpu_custom_call.1} parent=11 // pred_fallthru
          _
        // Predicated region
        $region17: #{tpu_custom_call.1} parent=11 // pred_check
          %p375 = pneg %p142
        $region18: #{tpu_custom_call.1} parent=11 // pred_check_branch
          %377 = sbr.rel (%p375) target = $region20
        $region19: #{tpu_custom_call.1} parent=11 // pred_region
          _
        $region20: #{tpu_custom_call.1} parent=11 // pred_fallthru
          _
        // Predicated region
        $region21: #{tpu_custom_call.1} parent=11 // pred_check
          %p378 = pneg %p163
        $region22: #{tpu_custom_call.1} parent=11 // pred_check_branch
          %380 = sbr.rel (%p378) target = $region24
        $region23: #{tpu_custom_call.1} parent=11 // pred_region
          _
        $region24: #{tpu_custom_call.1} parent=11 // pred_fallthru
          _
        // Predicated region
        $region25: #{tpu_custom_call.1} parent=11 // pred_check
          %p381 = pneg %p184
        $region26: #{tpu_custom_call.1} parent=11 // pred_check_branch
          %383 = sbr.rel (%p381) target = $region28
        $region27: #{tpu_custom_call.1} parent=11 // pred_region
          _
        $region28: #{tpu_custom_call.1} parent=11 // pred_fallthru
          _
        // Predicated region
        $region29: #{tpu_custom_call.1} parent=11 // pred_check
          %p384 = pneg %p205
        $region30: #{tpu_custom_call.1} parent=11 // pred_check_branch
          %386 = sbr.rel (%p384) target = $region32
        $region31: #{tpu_custom_call.1} parent=11 // pred_region
          %s388 = ssub.s32 16, 16
          %389 = vsyncadd [#allocation5], %s388
          %s391 = sshll.u32 [#allocation4], 4
          %s392 = int_to_ptr.vmem [resolvable:$true] %s391
          %394 = dma.hbm_to_vmem [thread:$0]  %s7, 16, %s392, [#allocation5]
        $region32: #{tpu_custom_call.1} parent=11 // pred_fallthru
          _
        // Predicated region
        $region33: #{tpu_custom_call.1} parent=11 // pred_check
          %p395 = pneg %p226
        $region34: #{tpu_custom_call.1} parent=11 // pred_check_branch
          %397 = sbr.rel (%p395) target = $region36
        $region35: #{tpu_custom_call.1} parent=11 // pred_region
          %s399 = ssub.s32 16, 16
          %400 = vsyncadd [#allocation7], %s399
          %s402 = sshll.u32 [#allocation6], 4
          %s403 = int_to_ptr.vmem [resolvable:$true] %s402
          %405 = dma.hbm_to_vmem [thread:$0]  %s8, 16, %s403, [#allocation7]
        $region36: #{tpu_custom_call.1} parent=11 // pred_fallthru
          _
        // Predicated region
        $region37: #{tpu_custom_call.1} parent=11 // pred_check
          %p406 = pneg %p247
        $region38: #{tpu_custom_call.1} parent=11 // pred_check_branch
          %408 = sbr.rel (%p406) target = $region40
        $region39: #{tpu_custom_call.1} parent=11 // pred_region
          %s410 = ssub.s32 16, 16
          %411 = vsyncadd [#allocation7], %s410
          %s413 = sshll.u32 [#allocation8], 4
          %s414 = int_to_ptr.vmem [resolvable:$true] %s413
          %416 = dma.hbm_to_vmem [thread:$0]  %s9, 16, %s414, [#allocation7]
        $region40: #{tpu_custom_call.1} parent=11 // pred_fallthru
          _
        // Predicated region
        $region41: #{tpu_custom_call.1} parent=11 // pred_check
          %p417 = pneg %p268
        $region42: #{tpu_custom_call.1} parent=11 // pred_check_branch
          %419 = sbr.rel (%p417) target = $region44
        $region43: #{tpu_custom_call.1} parent=11 // pred_region
          _
        $region44: #{tpu_custom_call.1} parent=11 // pred_fallthru
          _
        // Predicated region
        $region45: #{tpu_custom_call.1} parent=11 // pred_check
          %p420 = pneg %p289
        $region46: #{tpu_custom_call.1} parent=11 // pred_check_branch
          %422 = sbr.rel (%p420) target = $region48
        $region47: #{tpu_custom_call.1} parent=11 // pred_region
          _
        $region48: #{tpu_custom_call.1} parent=11 // pred_fallthru
          _
        // Predicated region
        $region49: #{tpu_custom_call.1} parent=11 // pred_check
          %p423 = pneg %p310
        $region50: #{tpu_custom_call.1} parent=11 // pred_check_branch
          %425 = sbr.rel (%p423) target = $region52
        $region51: #{tpu_custom_call.1} parent=11 // pred_region
          _
        $region52: #{tpu_custom_call.1} parent=11 // pred_fallthru
          _
        // Predicated region
        $region53: #{tpu_custom_call.1} parent=11 // pred_check
          %p426 = pneg %p331
        $region54: #{tpu_custom_call.1} parent=11 // pred_check_branch
          %428 = sbr.rel (%p426) target = $region56
        $region55: #{tpu_custom_call.1} parent=11 // pred_region
          _
        $region56: #{tpu_custom_call.1} parent=11 // pred_fallthru
          _
      $region12: #{tpu_custom_call.1} parent=5 // pred_fallthru
        _
      %p429 = scmp.lt.s32.totalorder %s22, 2
      // Predicated region
      $region57: #{tpu_custom_call.1} parent=5 // pred_check
        %p430 = pneg %p429
      $region58: #{tpu_custom_call.1} parent=5 // pred_check_branch
        %432 = sbr.rel (%p430) target = $region60
      $region59: #{tpu_custom_call.1} parent=5 // pred_region
        // Predicated region
        $region61: #{tpu_custom_call.1} parent=59 // pred_check
          %p433 = pneg %p42
        $region62: #{tpu_custom_call.1} parent=59 // pred_check_branch
          %435 = sbr.rel (%p433) target = $region64
        $region63: #{tpu_custom_call.1} parent=59 // pred_region
          %s436 = smul.u32 4, %s22
          %p437 = scmp.lt.s32.totalorder %s436, 7
          %s438 = scalar_select %p437, %s436, 7
          %s439 = smul.addr %s438, 4
          %s440 = scalar_lea.vmem %s0, %s439
          %s441 = smul.u32 4, %s22
        $region64: #{tpu_custom_call.1} parent=59 // pred_fallthru
          _
        // Predicated region
        $region65: #{tpu_custom_call.1} parent=59 // pred_check
          %p442 = pneg %p68
        $region66: #{tpu_custom_call.1} parent=59 // pred_check_branch
          %444 = sbr.rel (%p442) target = $region68
        $region67: #{tpu_custom_call.1} parent=59 // pred_region
          %s445 = smul.u32 2, %s22
          %p446 = scmp.lt.s32.totalorder %s445, 3
          %s447 = scalar_select %p446, %s445, 3
          %s448 = smul.addr %s447, 2
          %s449 = smul.addr %s448, 4
          %s450 = scalar_lea.vmem %s1, %s449
          %s451 = smul.u32 2, %s22
        $region68: #{tpu_custom_call.1} parent=59 // pred_fallthru
          _
        // Predicated region
        $region69: #{tpu_custom_call.1} parent=59 // pred_check
          %p452 = pneg %p94
        $region70: #{tpu_custom_call.1} parent=59 // pred_check_branch
          %454 = sbr.rel (%p452) target = $region72
        $region71: #{tpu_custom_call.1} parent=59 // pred_region
          %s455 = smul.u32 2, %s22
          %p456 = scmp.lt.s32.totalorder %s455, 3
          %s457 = scalar_select %p456, %s455, 3
          %s458 = smul.addr %s457, 2
          %s459 = smul.addr %s458, 4
          %s460 = scalar_lea.vmem %s2, %s459
          %s461 = smul.u32 2, %s22
        $region72: #{tpu_custom_call.1} parent=59 // pred_fallthru
          _
      $region60: #{tpu_custom_call.1} parent=5 // pred_fallthru
        _
      %p462 = scmp.le.s32.totalorder 1, %s22
      %p463 = scmp.lt.s32.totalorder %s22, 3
      %p464 = pnand %p462, %p463
      %p465 = pneg %p464
      // Predicated region
      $region73: #{tpu_custom_call.1} parent=5 // pred_check
        _
      $region74: #{tpu_custom_call.1} parent=5 // pred_check_branch
        %467 = sbr.rel (%p464) target = $region76
      $region75: #{tpu_custom_call.1} parent=5 // pred_region
        %s468 = ssub.s32 %s22, 1
        // Predicated region
        $region77: #{tpu_custom_call.1} parent=75 // pred_check
          %p469 = pneg %p205
        $region78: #{tpu_custom_call.1} parent=75 // pred_check_branch
          %471 = sbr.rel (%p469) target = $region80
        $region79: #{tpu_custom_call.1} parent=75 // pred_region
          %472 = dma.done [#allocation5], 16
        $region80: #{tpu_custom_call.1} parent=75 // pred_fallthru
          _
        // Predicated region
        $region81: #{tpu_custom_call.1} parent=75 // pred_check
          %p473 = pneg %p226
        $region82: #{tpu_custom_call.1} parent=75 // pred_check_branch
          %475 = sbr.rel (%p473) target = $region84
        $region83: #{tpu_custom_call.1} parent=75 // pred_region
          %476 = dma.done [#allocation7], 16
        $region84: #{tpu_custom_call.1} parent=75 // pred_fallthru
          _
        // Predicated region
        $region85: #{tpu_custom_call.1} parent=75 // pred_check
          %p477 = pneg %p247
        $region86: #{tpu_custom_call.1} parent=75 // pred_check_branch
          %479 = sbr.rel (%p477) target = $region88
        $region87: #{tpu_custom_call.1} parent=75 // pred_region
          %480 = dma.done [#allocation7], 16
        $region88: #{tpu_custom_call.1} parent=75 // pred_fallthru
          _
        %s481 = smul.u32 4, %s27
        %p482 = scmp.lt.s32.totalorder %s481, 7
        %s483 = scalar_select %p482, %s481, 7
        %s484 = smul.addr %s483, 4
        %s485 = scalar_lea.vmem %s0, %s484
        %p486 = pneg %p48
        %p487 = pneg %p45
        %s488 = smul.u32 2, %s27
        %p489 = scmp.lt.s32.totalorder %s488, 3
        %s490 = scalar_select %p489, %s488, 3
        %s491 = smul.addr %s490, 2
        %s492 = smul.addr %s491, 4
        %s493 = scalar_lea.vmem %s1, %s492
        %p494 = pneg %p74
        %p495 = pneg %p71
        %s496 = smul.u32 2, %s27
        %p497 = scmp.lt.s32.totalorder %s496, 3
        %s498 = scalar_select %p497, %s496, 3
        %s499 = smul.addr %s498, 2
        %s500 = smul.addr %s499, 4
        %s501 = scalar_lea.vmem %s2, %s500
        %p502 = pneg %p100
        %p503 = pneg %p97
        %p504 = pneg %p121
        %p505 = pneg %p118
        %p506 = pneg %p142
        %p507 = pneg %p139
        %p508 = pneg %p163
        %p509 = pneg %p160
        %p510 = pneg %p184
        %p511 = pneg %p181
        %p512 = pneg %p205
        %p513 = pneg %p202
        %p514 = pneg %p226
        %p515 = pneg %p223
        %p516 = pneg %p247
        %p517 = pneg %p244
        %p518 = pneg %p268
        %p519 = pneg %p265
        %p520 = pneg %p289
        %p521 = pneg %p286
        %p522 = pneg %p310
        %p523 = pneg %p307
        %p524 = pneg %p331
        %p525 = pneg %p328
        %p526 = pneg %p357
        %p527 = pneg %p354
        %s528 = smul.u32 4, %s27
        %p529 = scmp.lt.s32.totalorder %s528, 7
        %s530 = scalar_select %p529, %s528, 7
        %s531 = smul.addr %s530, 8
        %s532 = scalar_lea.vmem %s14, %s531
        %s533 = smul.u32 4, %s27
        %p534 = scmp.lt.s32.totalorder %s533, 7
        %s535 = scalar_select %p534, %s533, 7
        %s536 = smul.addr %s535, 4
        %s537 = scalar_lea.vmem %s0, %s536
        %s538 = smul.u32 4, %s27
        %s539 = smul.u32 2, %s27
        %p540 = scmp.lt.s32.totalorder %s539, 3
        %s541 = scalar_select %p540, %s539, 3
        %s542 = smul.addr %s541, 2
        %s543 = smul.addr %s542, 4
        %s544 = scalar_lea.vmem %s1, %s543
        %s545 = smul.u32 2, %s27
        %s546 = smul.u32 2, %s27
        %p547 = scmp.lt.s32.totalorder %s546, 3
        %s548 = scalar_select %p547, %s546, 3
        %s549 = smul.addr %s548, 2
        %s550 = smul.addr %s549, 4
        %s551 = scalar_lea.vmem %s2, %s550
        %s552 = smul.u32 2, %s27
        %s553 = smul.u32 4, %s27
        %p554 = scmp.lt.s32.totalorder %s553, 7
        %s555 = scalar_select %p554, %s553, 7
        %s556 = smul.addr %s555, 8
        %s557 = scalar_lea.vmem %s14, %s556
        %s558 = smul.u32 4, %s27
        %v560 = vld [vmem:[%s537] sm:$0xf]
        %v561 = vld [vmem:[%s537 + $0x4] sm:$0xf]
        %v562 = vld [vmem:[%s537 + $0x8] sm:$0xf]
        %v563 = vld [vmem:[%s537 + $0xc] sm:$0xf]
        %v564 = vunpack.c.l.bf16 %v560
        %v565 = vunpack.c.l.bf16 %v561
        %v566 = vunpack.c.l.bf16 %v562
        %v567 = vunpack.c.l.bf16 %v563
        %vm568 = vcmask 261120
        %v569 = vsel %vm568, %v564, 0.0
        %570 = vadd.xlane.f32.xlu0 %v569
        %v571 = vpop.xlane.xlu0 %570
        %v572 = vsel %vm568, %v565, 0.0
        %573 = vadd.xlane.f32.xlu0 %v572
        %v574 = vpop.xlane.xlu0 %573
        %v575 = vsel %vm568, %v566, 0.0
        %576 = vadd.xlane.f32.xlu0 %v575
        %v577 = vpop.xlane.xlu0 %576
        %v578 = vsel %vm568, %v567, 0.0
        %579 = vadd.xlane.f32.xlu0 %v578
        %v580 = vpop.xlane.xlu0 %579
        %v581 = vrcp.pop 32.0
        %v582 = vmul.f32 %v571, %v581
        %v583 = vmul.f32 %v574, %v581
        %v584 = vmul.f32 %v577, %v581
        %v585 = vmul.f32 %v580, %v581
        %v586 = vsub.f32 %v564, %v582
        %v587 = vsub.f32 %v565, %v583
        %v588 = vsub.f32 %v566, %v584
        %v589 = vsub.f32 %v567, %v585
        %v590 = vmul.f32 %v586, %v586
        %v591 = vmul.f32 %v587, %v587
        %v592 = vmul.f32 %v588, %v588
        %v593 = vmul.f32 %v589, %v589
        %v594 = vsel %vm568, %v590, 0.0
        %595 = vadd.xlane.f32.xlu0 %v594
        %v596 = vpop.xlane.xlu0 %595
        %v597 = vsel %vm568, %v591, 0.0
        %598 = vadd.xlane.f32.xlu0 %v597
        %v599 = vpop.xlane.xlu0 %598
        %v600 = vsel %vm568, %v592, 0.0
        %601 = vadd.xlane.f32.xlu0 %v600
        %v602 = vpop.xlane.xlu0 %601
        %v603 = vsel %vm568, %v593, 0.0
        %604 = vadd.xlane.f32.xlu0 %v603
        %v605 = vpop.xlane.xlu0 %604
        %v606 = vmul.f32 %v596, %v581
        %v607 = vmul.f32 %v599, %v581
        %v608 = vmul.f32 %v602, %v581
        %v609 = vmul.f32 %v605, %v581
        %v610 = vadd.f32 %v606, 1e-05
        %v611 = vadd.f32 %v607, 1e-05
        %v612 = vadd.f32 %v608, 1e-05
        %v613 = vadd.f32 %v609, 1e-05
        %v614 = vrsqrt.pop %v610
        %v615 = vrsqrt.pop %v611
        %v616 = vrsqrt.pop %v612
        %v617 = vrsqrt.pop %v613
        %v618 = vmul.f32 %v586, %v614
        %v619 = vmul.f32 %v587, %v615
        %v620 = vmul.f32 %v588, %v616
        %v621 = vmul.f32 %v589, %v617
        %v622 = vld [vmem:[%s6] sm:$0x1]
        %v624 = vlaneseq
        %v625 = vshrl.u32 %v624, 7
        %v626 = vsub.s32 0, %v625
        %v627 = vrot.slane %v622, %v626
        %v629 = vmul.f32 %v618, %v627
        %v630 = vmul.f32 %v619, %v627
        %v631 = vmul.f32 %v620, %v627
        %v632 = vmul.f32 %v621, %v627
        %v633 = vld [vmem:[#allocation4] sm:$0x1]
        %v635 = vlaneseq
        %v636 = vshrl.u32 %v635, 7
        %v637 = vsub.s32 0, %v636
        %v638 = vrot.slane %v633, %v637
        %v640 = vadd.f32 %v629, %v638
        %v641 = vadd.f32 %v630, %v638
        %v642 = vadd.f32 %v631, %v638
        %v643 = vadd.f32 %v632, %v638
        %v644 = vpack.c.bf16 %v641, %v640
        %v645 = vpack.c.bf16 %v643, %v642
        %v646 = vld [vmem:[%s3] sm:$0xf]
        %v647 = vld [vmem:[%s3 + $0x4] sm:$0xf]
        %v648 = vld [vmem:[%s3 + $0x8] sm:$0xf]
        %v649 = vld [vmem:[%s3 + $0xc] sm:$0xf]
        %v650 = vld [vmem:[%s4] sm:$0x1]
        %v652 = vlaneseq
        %v653 = vshrl.u32 %v652, 7
        %v654 = vsub.s32 0, %v653
        %v655 = vrot.slane %v650, %v654
        %v661 = vunpack.c.l.b16 %v646
        %v662 = vunpack.c.l.b16 %v647
        %v663 = vunpack.c.l.b16 %v648
        %v664 = vunpack.c.l.b16 %v649
        %v665 = vpack.c.b16 %v662, %v661
        %v666 = vpack.c.b16 %v664, %v663
        %v670 = vsel %vm568, %v644, 0
        %v673 = vsel %vm568, %v645, 0
        %675 = vmatprep.subr.bf16.mxu0 0
        %676 = vmatpush1.bf16.msra.mxu0 %v665
        %677 = vmatprep.subr.bf16.mxu0 0
        %678 = vmatpush1.bf16.msra.mxu0 %v666
        %679 = vmatprep.subr.bf16.mxu0 0
        %680 = vmatpush1.bf16.msra.mxu0 0
        %681 = vmatprep.subr.bf16.mxu0 0
        %682 = vmatpush1.bf16.msra.mxu0 0
        %683 = vmatprep.subr.bf16.mxu0 0
        %684 = vmatpush1.bf16.msra.mxu0 0
        %685 = vmatprep.subr.bf16.mxu0 0
        %686 = vmatpush1.bf16.msra.mxu0 0
        %687 = vmatprep.subr.bf16.mxu0 0
        %688 = vmatpush1.bf16.msra.mxu0 0
        %689 = vmatprep.subr.bf16.mxu0 0
        %690 = vmatpush1.bf16.msra.mxu0 0
        %691 = vmatprep.subr.bf16.mxu0 0
        %692 = vmatpush1.bf16.msra.mxu0 0
        %693 = vmatprep.subr.bf16.mxu0 0
        %694 = vmatpush1.bf16.msra.mxu0 0
        %695 = vmatprep.subr.bf16.mxu0 0
        %696 = vmatpush1.bf16.msra.mxu0 0
        %697 = vmatprep.subr.bf16.mxu0 0
        %698 = vmatpush1.bf16.msra.mxu0 0
        %699 = vmatprep.subr.bf16.mxu0 0
        %700 = vmatpush1.bf16.msra.mxu0 0
        %701 = vmatprep.subr.bf16.mxu0 0
        %702 = vmatpush1.bf16.msra.mxu0 0
        %703 = vmatprep.subr.bf16.mxu0 0
        %704 = vmatpush1.bf16.msra.mxu0 0
        %705 = vmatprep.subr.bf16.mxu0 0
        %706 = vmatpush1.bf16.msra.mxu0 0
        %707 = vmatprep.mubr.bf16.mxu0 0
        %708 = vmatmul.mubr.bf16.gmra.mrb[0].mxu0 %v670
        %v709 = vpop.f32.mrb[0].mxu0
        %v710 = vadd.f32 %v655, %v709
        %v711 = vpop.f32.mrb[0].mxu0
        %v712 = vpop.f32.mrb[0].mxu0
        %v713 = vadd.f32 %v655, %v712
        %v714 = vpop.f32.mrb[0].mxu0
        %715 = vmatprep.mubr.bf16.mxu0 0
        %716 = vmatmul.mubr.bf16.gmra.mrb[0].mxu0 %v673
        %v717 = vpop.f32.mrb[0].mxu0
        %v718 = vadd.f32 %v655, %v717
        %v719 = vpop.f32.mrb[0].mxu0
        %v720 = vpop.f32.mrb[0].mxu0
        %v721 = vadd.f32 %v655, %v720
        %v722 = vpop.f32.mrb[0].mxu0
        %723 = vdwg.mxu0
        %vm724 = vcmask 785408
        %725 = vst.msk [vmem:[#allocation2] sm:$0xff] %vm724, %v710
        %726 = vst.msk [vmem:[#allocation2 + $0x8] sm:$0xff] %vm724, %v713
        %727 = vst.msk [vmem:[#allocation2 + $0x10] sm:$0xff] %vm724, %v718
        %728 = vst.msk [vmem:[#allocation2 + $0x18] sm:$0xff] %vm724, %v721
        loop: start=0, step=1, limit=2
        $region89: #{tpu_custom_call.1} parent=75 // loop_pre_header
          _
        $region90: #{tpu_custom_call.1} parent=75 // loop_header
          %s730 = sphi 0, %s734
          %p731 = scmp.ge.s32.totalorder %s730, 2
        $region91: #{tpu_custom_call.1} parent=75 // loop_header_branch
          %733 = sbr.rel (%p731) target = $region95
        $region92: #{tpu_custom_call.1} parent=75 // loop_body
          %s735 = smul.u32 %s730, 16
          %s736 = smul.u32 %s730, 2
          %s737 = smul.addr %s736, 4
          %s738 = scalar_lea.vmem %s544, %s737
          %v739 = vld [vmem:[%s738] sm:$0xf]
          %v740 = vld [vmem:[%s738 + $0x4] sm:$0xf]
          %v741 = vunpack.c.l.bf16 %v739
          %v742 = vunpack.c.l.bf16 %v740
          %s743 = smul.addr %s736, 4
          %s744 = scalar_lea.vmem %s551, %s743
          %v745 = vld [vmem:[%s744] sm:$0xf]
          %v746 = vld [vmem:[%s744 + $0x4] sm:$0xf]
          %v747 = vunpack.c.l.bf16 %v745
          %v748 = vunpack.c.l.bf16 %v746
          %s749 = scalar_lea.vmem [#allocation2], %s735
          %v750 = vld [vmem:[%s749] sm:$0xff]
          %v751 = vld [vmem:[%s749 + $0x8] sm:$0xff]
          %v752 = vpack.c.bf16 %v751, %v750
          %754 = vrot.lane.b32.xlu0 %v752, 96
          %v755 = vpop.permute.xlu0 %754
          %756 = vrot.lane.b32.xlu0 %v752, 64
          %v757 = vpop.permute.xlu0 %756
          %vm758 = vcmask 64512
          %v760 = vsel %vm758, %v755, 0
          %v763 = vsel %vm758, %v757, 0
          %765 = vmatprep.subr.bf16.mxu0 0
          %766 = vmatpush1.bf16.xpose.msra.mxu0 %v763
          %767 = vmatprep.subr.bf16.mxu0 0
          %768 = vmatpush1.bf16.xpose.msra.mxu0 0
          %769 = vmatprep.subr.bf16.mxu0 0
          %770 = vmatpush1.bf16.xpose.msra.mxu0 0
          %771 = vmatprep.subr.bf16.mxu0 0
          %772 = vmatpush1.bf16.xpose.msra.mxu0 0
          %773 = vmatprep.subr.bf16.mxu0 0
          %774 = vmatpush1.bf16.xpose.msra.mxu0 0
          %775 = vmatprep.subr.bf16.mxu0 0
          %776 = vmatpush1.bf16.xpose.msra.mxu0 0
          %777 = vmatprep.subr.bf16.mxu0 0
          %778 = vmatpush1.bf16.xpose.msra.mxu0 0
          %779 = vmatprep.subr.bf16.mxu0 0
          %780 = vmatpush1.bf16.xpose.msra.mxu0 0
          %781 = vmatprep.subr.bf16.mxu0 0
          %782 = vmatpush1.bf16.xpose.msra.mxu0 0
          %783 = vmatprep.subr.bf16.mxu0 0
          %784 = vmatpush1.bf16.xpose.msra.mxu0 0
          %785 = vmatprep.subr.bf16.mxu0 0
          %786 = vmatpush1.bf16.xpose.msra.mxu0 0
          %787 = vmatprep.subr.bf16.mxu0 0
          %788 = vmatpush1.bf16.xpose.msra.mxu0 0
          %789 = vmatprep.subr.bf16.mxu0 0
          %790 = vmatpush1.bf16.xpose.msra.mxu0 0
          %791 = vmatprep.subr.bf16.mxu0 0
          %792 = vmatpush1.bf16.xpose.msra.mxu0 0
          %793 = vmatprep.subr.bf16.mxu0 0
          %794 = vmatpush1.bf16.xpose.msra.mxu0 0
          %795 = vmatprep.subr.bf16.mxu0 0
          %796 = vmatpush1.bf16.xpose.msra.mxu0 0
          %797 = vmatprep.mubr.bf16.mxu0 0
          %798 = vmatmul.mubr.bf16.gmra.mrb[0].mxu0 %v760
          %v799 = vpop.f32.mrb[0].mxu0
          %v800 = vadd.f32 %v741, %v799
          %v801 = vpop.f32.mrb[0].mxu0
          %v802 = vpop.f32.mrb[0].mxu0
          %v803 = vadd.f32 %v742, %v802
          %v804 = vpop.f32.mrb[0].mxu0
          %805 = vdwg.mxu0
          %vm806 = vcmask 130048
          %v807 = vsel %vm806, %v800, -inf
          %808 = vmax.xlane.f32.xlu0 %v807
          %v809 = vpop.xlane.xlu0 %808
          %v810 = vsel %vm806, %v803, -inf
          %811 = vmax.xlane.f32.xlu0 %v810
          %v812 = vpop.xlane.xlu0 %811
          %v813 = vsub.f32 %v800, %v809
          %v814 = vsub.f32 %v803, %v812
          %v815 = vmul.f32 %v813, 1.442695
          %v816 = vpow.pop %v815
          %v817 = vmul.f32 %v814, 1.442695
          %v818 = vpow.pop %v817
          %v819 = vsel %vm806, %v816, 0.0
          %820 = vadd.xlane.f32.xlu0 %v819
          %v821 = vpop.xlane.xlu0 %820
          %v822 = vsel %vm806, %v818, 0.0
          %823 = vadd.xlane.f32.xlu0 %v822
          %v824 = vpop.xlane.xlu0 %823
          %v825 = vrcp.pop %v821
          %v826 = vrcp.pop %v824
          %v827 = vmul.f32 %v816, %v825
          %v828 = vmul.f32 %v818, %v826
          %v829 = vmul.f32 %v827, %v747
          %v830 = vmul.f32 %v828, %v748
          %v831 = vpack.c.bf16 %v830, %v829
          %v833 = vsel %vm806, %v831, 0
          %835 = vmatprep.subr.bf16.mxu0 0
          %836 = vmatpush1.bf16.msra.mxu0 %v752
          %837 = vmatprep.subr.bf16.mxu0 0
          %838 = vmatpush1.bf16.msra.mxu0 0
          %839 = vmatprep.subr.bf16.mxu0 0
          %840 = vmatpush1.bf16.msra.mxu0 0
          %841 = vmatprep.subr.bf16.mxu0 0
          %842 = vmatpush1.bf16.msra.mxu0 0
          %843 = vmatprep.subr.bf16.mxu0 0
          %844 = vmatpush1.bf16.msra.mxu0 0
          %845 = vmatprep.subr.bf16.mxu0 0
          %846 = vmatpush1.bf16.msra.mxu0 0
          %847 = vmatprep.subr.bf16.mxu0 0
          %848 = vmatpush1.bf16.msra.mxu0 0
          %849 = vmatprep.subr.bf16.mxu0 0
          %850 = vmatpush1.bf16.msra.mxu0 0
          %851 = vmatprep.subr.bf16.mxu0 0
          %852 = vmatpush1.bf16.msra.mxu0 0
          %853 = vmatprep.subr.bf16.mxu0 0
          %854 = vmatpush1.bf16.msra.mxu0 0
          %855 = vmatprep.subr.bf16.mxu0 0
          %856 = vmatpush1.bf16.msra.mxu0 0
          %857 = vmatprep.subr.bf16.mxu0 0
          %858 = vmatpush1.bf16.msra.mxu0 0
          %859 = vmatprep.subr.bf16.mxu0 0
          %860 = vmatpush1.bf16.msra.mxu0 0
          %861 = vmatprep.subr.bf16.mxu0 0
          %862 = vmatpush1.bf16.msra.mxu0 0
          %863 = vmatprep.subr.bf16.mxu0 0
          %864 = vmatpush1.bf16.msra.mxu0 0
          %865 = vmatprep.subr.bf16.mxu0 0
          %866 = vmatpush1.bf16.msra.mxu0 0
          %867 = vmatprep.mubr.bf16.mxu0 0
          %868 = vmatmul.mubr.bf16.gmra.mrb[0].mxu0 %v833
          %v869 = vpop.f32.mrb[0].mxu0
          %v870 = vadd.f32 0.0, %v869
          %v871 = vpop.f32.mrb[0].mxu0
          %v872 = vpop.f32.mrb[0].mxu0
          %v873 = vadd.f32 0.0, %v872
          %v874 = vpop.f32.mrb[0].mxu0
          %875 = vdwg.mxu0
          %876 = vrot.lane.b32.xlu0 %v752, 88
          %v877 = vpop.permute.xlu0 %876
          %878 = vrot.lane.b32.xlu0 %v752, 56
          %v879 = vpop.permute.xlu0 %878
          %v881 = vsel %vm758, %v877, 0
          %v884 = vsel %vm758, %v879, 0
          %886 = vmatprep.subr.bf16.mxu0 0
          %887 = vmatpush1.bf16.xpose.msra.mxu0 %v884
          %888 = vmatprep.subr.bf16.mxu0 0
          %889 = vmatpush1.bf16.xpose.msra.mxu0 0
          %890 = vmatprep.subr.bf16.mxu0 0
          %891 = vmatpush1.bf16.xpose.msra.mxu0 0
          %892 = vmatprep.subr.bf16.mxu0 0
          %893 = vmatpush1.bf16.xpose.msra.mxu0 0
          %894 = vmatprep.subr.bf16.mxu0 0
          %895 = vmatpush1.bf16.xpose.msra.mxu0 0
          %896 = vmatprep.subr.bf16.mxu0 0
          %897 = vmatpush1.bf16.xpose.msra.mxu0 0
          %898 = vmatprep.subr.bf16.mxu0 0
          %899 = vmatpush1.bf16.xpose.msra.mxu0 0
          %900 = vmatprep.subr.bf16.mxu0 0
          %901 = vmatpush1.bf16.xpose.msra.mxu0 0
          %902 = vmatprep.subr.bf16.mxu0 0
          %903 = vmatpush1.bf16.xpose.msra.mxu0 0
          %904 = vmatprep.subr.bf16.mxu0 0
          %905 = vmatpush1.bf16.xpose.msra.mxu0 0
          %906 = vmatprep.subr.bf16.mxu0 0
          %907 = vmatpush1.bf16.xpose.msra.mxu0 0
          %908 = vmatprep.subr.bf16.mxu0 0
          %909 = vmatpush1.bf16.xpose.msra.mxu0 0
          %910 = vmatprep.subr.bf16.mxu0 0
          %911 = vmatpush1.bf16.xpose.msra.mxu0 0
          %912 = vmatprep.subr.bf16.mxu0 0
          %913 = vmatpush1.bf16.xpose.msra.mxu0 0
          %914 = vmatprep.subr.bf16.mxu0 0
          %915 = vmatpush1.bf16.xpose.msra.mxu0 0
          %916 = vmatprep.subr.bf16.mxu0 0
          %917 = vmatpush1.bf16.xpose.msra.mxu0 0
          %918 = vmatprep.mubr.bf16.mxu0 0
          %919 = vmatmul.mubr.bf16.gmra.mrb[0].mxu0 %v881
          %v920 = vpop.f32.mrb[0].mxu0
          %v921 = vadd.f32 %v741, %v920
          %v922 = vpop.f32.mrb[0].mxu0
          %v923 = vpop.f32.mrb[0].mxu0
          %v924 = vadd.f32 %v742, %v923
          %v925 = vpop.f32.mrb[0].mxu0
          %926 = vdwg.mxu0
          %v927 = vsel %vm806, %v921, -inf
          %928 = vmax.xlane.f32.xlu0 %v927
          %v929 = vpop.xlane.xlu0 %928
          %v930 = vsel %vm806, %v924, -inf
          %931 = vmax.xlane.f32.xlu0 %v930
          %v932 = vpop.xlane.xlu0 %931
          %v933 = vsub.f32 %v921, %v929
          %v934 = vsub.f32 %v924, %v932
          %v935 = vmul.f32 %v933, 1.442695
          %v936 = vpow.pop %v935
          %v937 = vmul.f32 %v934, 1.442695
          %v938 = vpow.pop %v937
          %v939 = vsel %vm806, %v936, 0.0
          %940 = vadd.xlane.f32.xlu0 %v939
          %v941 = vpop.xlane.xlu0 %940
          %v942 = vsel %vm806, %v938, 0.0
          %943 = vadd.xlane.f32.xlu0 %v942
          %v944 = vpop.xlane.xlu0 %943
          %v945 = vrcp.pop %v941
          %v946 = vrcp.pop %v944
          %v947 = vmul.f32 %v936, %v945
          %v948 = vmul.f32 %v938, %v946
          %v949 = vmul.f32 %v947, %v747
          %v950 = vmul.f32 %v948, %v748
          %v951 = vpack.c.bf16 %v950, %v949
          %952 = vrot.lane.b32.xlu0 %v752, 120
          %v953 = vpop.permute.xlu0 %952
          %v956 = vsel %vm806, %v951, 0
          %958 = vmatprep.subr.bf16.mxu0 0
          %959 = vmatpush1.bf16.msra.mxu0 %v953
          %960 = vmatprep.subr.bf16.mxu0 0
          %961 = vmatpush1.bf16.msra.mxu0 0
          %962 = vmatprep.subr.bf16.mxu0 0
          %963 = vmatpush1.bf16.msra.mxu0 0
          %964 = vmatprep.subr.bf16.mxu0 0
          %965 = vmatpush1.bf16.msra.mxu0 0
          %966 = vmatprep.subr.bf16.mxu0 0
          %967 = vmatpush1.bf16.msra.mxu0 0
          %968 = vmatprep.subr.bf16.mxu0 0
          %969 = vmatpush1.bf16.msra.mxu0 0
          %970 = vmatprep.subr.bf16.mxu0 0
          %971 = vmatpush1.bf16.msra.mxu0 0
          %972 = vmatprep.subr.bf16.mxu0 0
          %973 = vmatpush1.bf16.msra.mxu0 0
          %974 = vmatprep.subr.bf16.mxu0 0
          %975 = vmatpush1.bf16.msra.mxu0 0
          %976 = vmatprep.subr.bf16.mxu0 0
          %977 = vmatpush1.bf16.msra.mxu0 0
          %978 = vmatprep.subr.bf16.mxu0 0
          %979 = vmatpush1.bf16.msra.mxu0 0
          %980 = vmatprep.subr.bf16.mxu0 0
          %981 = vmatpush1.bf16.msra.mxu0 0
          %982 = vmatprep.subr.bf16.mxu0 0
          %983 = vmatpush1.bf16.msra.mxu0 0
          %984 = vmatprep.subr.bf16.mxu0 0
          %985 = vmatpush1.bf16.msra.mxu0 0
          %986 = vmatprep.subr.bf16.mxu0 0
          %987 = vmatpush1.bf16.msra.mxu0 0
          %988 = vmatprep.subr.bf16.mxu0 0
          %989 = vmatpush1.bf16.msra.mxu0 0
          %990 = vmatprep.mubr.bf16.mxu0 0
          %991 = vmatmul.mubr.bf16.gmra.mrb[0].mxu0 %v956
          %v992 = vpop.f32.mrb[0].mxu0
          %v993 = vadd.f32 0.0, %v992
          %v994 = vpop.f32.mrb[0].mxu0
          %v995 = vpop.f32.mrb[0].mxu0
          %v996 = vadd.f32 0.0, %v995
          %v997 = vpop.f32.mrb[0].mxu0
          %998 = vdwg.mxu0
          %999 = vrot.lane.b32.xlu0 %v752, 80
          %v1000 = vpop.permute.xlu0 %999
          %1001 = vrot.lane.b32.xlu0 %v752, 48
          %v1002 = vpop.permute.xlu0 %1001
          %v1004 = vsel %vm758, %v1000, 0
          %v1007 = vsel %vm758, %v1002, 0
          %1009 = vmatprep.subr.bf16.mxu0 0
          %1010 = vmatpush1.bf16.xpose.msra.mxu0 %v1007
          %1011 = vmatprep.subr.bf16.mxu0 0
          %1012 = vmatpush1.bf16.xpose.msra.mxu0 0
          %1013 = vmatprep.subr.bf16.mxu0 0
          %1014 = vmatpush1.bf16.xpose.msra.mxu0 0
          %1015 = vmatprep.subr.bf16.mxu0 0
          %1016 = vmatpush1.bf16.xpose.msra.mxu0 0
          %1017 = vmatprep.subr.bf16.mxu0 0
          %1018 = vmatpush1.bf16.xpose.msra.mxu0 0
          %1019 = vmatprep.subr.bf16.mxu0 0
          %1020 = vmatpush1.bf16.xpose.msra.mxu0 0
          %1021 = vmatprep.subr.bf16.mxu0 0
          %1022 = vmatpush1.bf16.xpose.msra.mxu0 0
          %1023 = vmatprep.subr.bf16.mxu0 0
          %1024 = vmatpush1.bf16.xpose.msra.mxu0 0
          %1025 = vmatprep.subr.bf16.mxu0 0
          %1026 = vmatpush1.bf16.xpose.msra.mxu0 0
          %1027 = vmatprep.subr.bf16.mxu0 0
          %1028 = vmatpush1.bf16.xpose.msra.mxu0 0
          %1029 = vmatprep.subr.bf16.mxu0 0
          %1030 = vmatpush1.bf16.xpose.msra.mxu0 0
          %1031 = vmatprep.subr.bf16.mxu0 0
          %1032 = vmatpush1.bf16.xpose.msra.mxu0 0
          %1033 = vmatprep.subr.bf16.mxu0 0
          %1034 = vmatpush1.bf16.xpose.msra.mxu0 0
          %1035 = vmatprep.subr.bf16.mxu0 0
          %1036 = vmatpush1.bf16.xpose.msra.mxu0 0
          %1037 = vmatprep.subr.bf16.mxu0 0
          %1038 = vmatpush1.bf16.xpose.msra.mxu0 0
          %1039 = vmatprep.subr.bf16.mxu0 0
          %1040 = vmatpush1.bf16.xpose.msra.mxu0 0
          %1041 = vmatprep.mubr.bf16.mxu0 0
          %1042 = vmatmul.mubr.bf16.gmra.mrb[0].mxu0 %v1004
          %v1043 = vpop.f32.mrb[0].mxu0
          %v1044 = vadd.f32 %v741, %v1043
          %v1045 = vpop.f32.mrb[0].mxu0
          %v1046 = vpop.f32.mrb[0].mxu0
          %v1047 = vadd.f32 %v742, %v1046
          %v1048 = vpop.f32.mrb[0].mxu0
          %1049 = vdwg.mxu0
          %v1050 = vsel %vm806, %v1044, -inf
          %1051 = vmax.xlane.f32.xlu0 %v1050
          %v1052 = vpop.xlane.xlu0 %1051
          %v1053 = vsel %vm806, %v1047, -inf
          %1054 = vmax.xlane.f32.xlu0 %v1053
          %v1055 = vpop.xlane.xlu0 %1054
          %v1056 = vsub.f32 %v1044, %v1052
          %v1057 = vsub.f32 %v1047, %v1055
          %v1058 = vmul.f32 %v1056, 1.442695
          %v1059 = vpow.pop %v1058
          %v1060 = vmul.f32 %v1057, 1.442695
          %v1061 = vpow.pop %v1060
          %v1062 = vsel %vm806, %v1059, 0.0
          %1063 = vadd.xlane.f32.xlu0 %v1062
          %v1064 = vpop.xlane.xlu0 %1063
          %v1065 = vsel %vm806, %v1061, 0.0
          %1066 = vadd.xlane.f32.xlu0 %v1065
          %v1067 = vpop.xlane.xlu0 %1066
          %v1068 = vrcp.pop %v1064
          %v1069 = vrcp.pop %v1067
          %v1070 = vmul.f32 %v1059, %v1068
          %v1071 = vmul.f32 %v1061, %v1069
          %v1072 = vmul.f32 %v1070, %v747
          %v1073 = vmul.f32 %v1071, %v748
          %v1074 = vpack.c.bf16 %v1073, %v1072
          %1075 = vrot.lane.b32.xlu0 %v752, 112
          %v1076 = vpop.permute.xlu0 %1075
          %v1079 = vsel %vm806, %v1074, 0
          %1081 = vmatprep.subr.bf16.mxu0 0
          %1082 = vmatpush1.bf16.msra.mxu0 %v1076
          %1083 = vmatprep.subr.bf16.mxu0 0
          %1084 = vmatpush1.bf16.msra.mxu0 0
          %1085 = vmatprep.subr.bf16.mxu0 0
          %1086 = vmatpush1.bf16.msra.mxu0 0
          %1087 = vmatprep.subr.bf16.mxu0 0
          %1088 = vmatpush1.bf16.msra.mxu0 0
          %1089 = vmatprep.subr.bf16.mxu0 0
          %1090 = vmatpush1.bf16.msra.mxu0 0
          %1091 = vmatprep.subr.bf16.mxu0 0
          %1092 = vmatpush1.bf16.msra.mxu0 0
          %1093 = vmatprep.subr.bf16.mxu0 0
          %1094 = vmatpush1.bf16.msra.mxu0 0
          %1095 = vmatprep.subr.bf16.mxu0 0
          %1096 = vmatpush1.bf16.msra.mxu0 0
          %1097 = vmatprep.subr.bf16.mxu0 0
          %1098 = vmatpush1.bf16.msra.mxu0 0
          %1099 = vmatprep.subr.bf16.mxu0 0
          %1100 = vmatpush1.bf16.msra.mxu0 0
          %1101 = vmatprep.subr.bf16.mxu0 0
          %1102 = vmatpush1.bf16.msra.mxu0 0
          %1103 = vmatprep.subr.bf16.mxu0 0
          %1104 = vmatpush1.bf16.msra.mxu0 0
          %1105 = vmatprep.subr.bf16.mxu0 0
          %1106 = vmatpush1.bf16.msra.mxu0 0
          %1107 = vmatprep.subr.bf16.mxu0 0
          %1108 = vmatpush1.bf16.msra.mxu0 0
          %1109 = vmatprep.subr.bf16.mxu0 0
          %1110 = vmatpush1.bf16.msra.mxu0 0
          %1111 = vmatprep.subr.bf16.mxu0 0
          %1112 = vmatpush1.bf16.msra.mxu0 0
          %1113 = vmatprep.mubr.bf16.mxu0 0
          %1114 = vmatmul.mubr.bf16.gmra.mrb[0].mxu0 %v1079
          %v1115 = vpop.f32.mrb[0].mxu0
          %v1116 = vadd.f32 0.0, %v1115
          %v1117 = vpop.f32.mrb[0].mxu0
          %v1118 = vpop.f32.mrb[0].mxu0
          %v1119 = vadd.f32 0.0, %v1118
          %v1120 = vpop.f32.mrb[0].mxu0
          %1121 = vdwg.mxu0
          %1122 = vrot.lane.b32.xlu0 %v752, 72
          %v1123 = vpop.permute.xlu0 %1122
          %1124 = vrot.lane.b32.xlu0 %v752, 40
          %v1125 = vpop.permute.xlu0 %1124
          %v1127 = vsel %vm758, %v1123, 0
          %v1130 = vsel %vm758, %v1125, 0
          %1132 = vmatprep.subr.bf16.mxu0 0
          %1133 = vmatpush1.bf16.xpose.msra.mxu0 %v1130
          %1134 = vmatprep.subr.bf16.mxu0 0
          %1135 = vmatpush1.bf16.xpose.msra.mxu0 0
          %1136 = vmatprep.subr.bf16.mxu0 0
          %1137 = vmatpush1.bf16.xpose.msra.mxu0 0
          %1138 = vmatprep.subr.bf16.mxu0 0
          %1139 = vmatpush1.bf16.xpose.msra.mxu0 0
          %1140 = vmatprep.subr.bf16.mxu0 0
          %1141 = vmatpush1.bf16.xpose.msra.mxu0 0
          %1142 = vmatprep.subr.bf16.mxu0 0
          %1143 = vmatpush1.bf16.xpose.msra.mxu0 0
          %1144 = vmatprep.subr.bf16.mxu0 0
          %1145 = vmatpush1.bf16.xpose.msra.mxu0 0
          %1146 = vmatprep.subr.bf16.mxu0 0
          %1147 = vmatpush1.bf16.xpose.msra.mxu0 0
          %1148 = vmatprep.subr.bf16.mxu0 0
          %1149 = vmatpush1.bf16.xpose.msra.mxu0 0
          %1150 = vmatprep.subr.bf16.mxu0 0
          %1151 = vmatpush1.bf16.xpose.msra.mxu0 0
          %1152 = vmatprep.subr.bf16.mxu0 0
          %1153 = vmatpush1.bf16.xpose.msra.mxu0 0
          %1154 = vmatprep.subr.bf16.mxu0 0
          %1155 = vmatpush1.bf16.xpose.msra.mxu0 0
          %1156 = vmatprep.subr.bf16.mxu0 0
          %1157 = vmatpush1.bf16.xpose.msra.mxu0 0
          %1158 = vmatprep.subr.bf16.mxu0 0
          %1159 = vmatpush1.bf16.xpose.msra.mxu0 0
          %1160 = vmatprep.subr.bf16.mxu0 0
          %1161 = vmatpush1.bf16.xpose.msra.mxu0 0
          %1162 = vmatprep.subr.bf16.mxu0 0
          %1163 = vmatpush1.bf16.xpose.msra.mxu0 0
          %1164 = vmatprep.mubr.bf16.mxu0 0
          %1165 = vmatmul.mubr.bf16.gmra.mrb[0].mxu0 %v1127
          %v1166 = vpop.f32.mrb[0].mxu0
          %v1167 = vadd.f32 %v741, %v1166
          %v1168 = vpop.f32.mrb[0].mxu0
          %v1169 = vpop.f32.mrb[0].mxu0
          %v1170 = vadd.f32 %v742, %v1169
          %v1171 = vpop.f32.mrb[0].mxu0
          %1172 = vdwg.mxu0
          %v1173 = vsel %vm806, %v1167, -inf
          %1174 = vmax.xlane.f32.xlu0 %v1173
          %v1175 = vpop.xlane.xlu0 %1174
          %v1176 = vsel %vm806, %v1170, -inf
          %1177 = vmax.xlane.f32.xlu0 %v1176
          %v1178 = vpop.xlane.xlu0 %1177
          %v1179 = vsub.f32 %v1167, %v1175
          %v1180 = vsub.f32 %v1170, %v1178
          %v1181 = vmul.f32 %v1179, 1.442695
          %v1182 = vpow.pop %v1181
          %v1183 = vmul.f32 %v1180, 1.442695
          %v1184 = vpow.pop %v1183
          %v1185 = vsel %vm806, %v1182, 0.0
          %1186 = vadd.xlane.f32.xlu0 %v1185
          %v1187 = vpop.xlane.xlu0 %1186
          %v1188 = vsel %vm806, %v1184, 0.0
          %1189 = vadd.xlane.f32.xlu0 %v1188
          %v1190 = vpop.xlane.xlu0 %1189
          %v1191 = vrcp.pop %v1187
          %v1192 = vrcp.pop %v1190
          %v1193 = vmul.f32 %v1182, %v1191
          %v1194 = vmul.f32 %v1184, %v1192
          %v1195 = vmul.f32 %v1193, %v747
          %v1196 = vmul.f32 %v1194, %v748
          %v1197 = vpack.c.bf16 %v1196, %v1195
          %1198 = vrot.lane.b32.xlu0 %v752, 104
          %v1199 = vpop.permute.xlu0 %1198
          %v1202 = vsel %vm806, %v1197, 0
          %1204 = vmatprep.subr.bf16.mxu0 0
          %1205 = vmatpush1.bf16.msra.mxu0 %v1199
          %1206 = vmatprep.subr.bf16.mxu0 0
          %1207 = vmatpush1.bf16.msra.mxu0 0
          %1208 = vmatprep.subr.bf16.mxu0 0
          %1209 = vmatpush1.bf16.msra.mxu0 0
          %1210 = vmatprep.subr.bf16.mxu0 0
          %1211 = vmatpush1.bf16.msra.mxu0 0
          %1212 = vmatprep.subr.bf16.mxu0 0
          %1213 = vmatpush1.bf16.msra.mxu0 0
          %1214 = vmatprep.subr.bf16.mxu0 0
          %1215 = vmatpush1.bf16.msra.mxu0 0
          %1216 = vmatprep.subr.bf16.mxu0 0
          %1217 = vmatpush1.bf16.msra.mxu0 0
          %1218 = vmatprep.subr.bf16.mxu0 0
          %1219 = vmatpush1.bf16.msra.mxu0 0
          %1220 = vmatprep.subr.bf16.mxu0 0
          %1221 = vmatpush1.bf16.msra.mxu0 0
          %1222 = vmatprep.subr.bf16.mxu0 0
          %1223 = vmatpush1.bf16.msra.mxu0 0
          %1224 = vmatprep.subr.bf16.mxu0 0
          %1225 = vmatpush1.bf16.msra.mxu0 0
          %1226 = vmatprep.subr.bf16.mxu0 0
          %1227 = vmatpush1.bf16.msra.mxu0 0
          %1228 = vmatprep.subr.bf16.mxu0 0
          %1229 = vmatpush1.bf16.msra.mxu0 0
          %1230 = vmatprep.subr.bf16.mxu0 0
          %1231 = vmatpush1.bf16.msra.mxu0 0
          %1232 = vmatprep.subr.bf16.mxu0 0
          %1233 = vmatpush1.bf16.msra.mxu0 0
          %1234 = vmatprep.subr.bf16.mxu0 0
          %1235 = vmatpush1.bf16.msra.mxu0 0
          %1236 = vmatprep.mubr.bf16.mxu0 0
          %1237 = vmatmul.mubr.bf16.gmra.mrb[0].mxu0 %v1202
          %v1238 = vpop.f32.mrb[0].mxu0
          %v1239 = vadd.f32 0.0, %v1238
          %v1240 = vpop.f32.mrb[0].mxu0
          %v1241 = vpop.f32.mrb[0].mxu0
          %v1242 = vadd.f32 0.0, %v1241
          %v1243 = vpop.f32.mrb[0].mxu0
          %1244 = vdwg.mxu0
          %1247 = vrot.lane.b32.xlu0 %v993, 8
          %v1248 = vpop.permute.xlu0 %1247
          %1249 = vrot.lane.b32.xlu0 %v996, 8
          %v1250 = vpop.permute.xlu0 %1249
          %1255 = vrot.lane.b32.xlu0 %v1116, 16
          %v1256 = vpop.permute.xlu0 %1255
          %1257 = vrot.lane.b32.xlu0 %v1119, 16
          %v1258 = vpop.permute.xlu0 %1257
          %1263 = vrot.lane.b32.xlu0 %v1239, 24
          %v1264 = vpop.permute.xlu0 %1263
          %1265 = vrot.lane.b32.xlu0 %v1242, 24
          %v1266 = vpop.permute.xlu0 %1265
          %v1269 = vsel %vm758, %v870, %v1248
          %v1270 = vsel %vm758, %v873, %v1250
          %v1271 = vsel %vm806, %v1269, %v1256
          %v1272 = vsel %vm806, %v1270, %v1258
          %vm1273 = vcmask 195584
          %v1274 = vsel %vm1273, %v1271, %v1264
          %v1275 = vsel %vm1273, %v1272, %v1266
          %s1276 = scalar_lea.vmem [#allocation3], %s735
          %1277 = vst.msk [vmem:[%s1276] sm:$0xff] %vm568, %v1274
          %1278 = vst.msk [vmem:[%s1276 + $0x8] sm:$0xff] %vm568, %v1275
        $region93: #{tpu_custom_call.1} parent=75 // loop_footer
          %s734 = sadd.s32 1, %s730
        $region94: #{tpu_custom_call.1} parent=75 // loop_footer_branch
          %729 = sbr.rel target = $region90
        $region95: #{tpu_custom_call.1} parent=75 // loop_exit
          _
        %v1279 = vld [vmem:[#allocation3] sm:$0xff]
        %v1280 = vld [vmem:[#allocation3 + $0x8] sm:$0xff]
        %v1281 = vld [vmem:[#allocation3 + $0x10] sm:$0xff]
        %v1282 = vld [vmem:[#allocation3 + $0x18] sm:$0xff]
        %vm1283 = vcmp.gt.f32.partialorder %v1279, 0.0
        %vm1284 = vcmp.gt.f32.partialorder %v1280, 0.0
        %vm1285 = vcmp.gt.f32.partialorder %v1281, 0.0
        %vm1286 = vcmp.gt.f32.partialorder %v1282, 0.0
        %v1287 = vmul.f32 %v1279, 0.01
        %v1288 = vmul.f32 %v1280, 0.01
        %v1289 = vmul.f32 %v1281, 0.01
        %v1290 = vmul.f32 %v1282, 0.01
        %v1291 = vsel %vm1283, %v1279, %v1287
        %v1292 = vsel %vm1284, %v1280, %v1288
        %v1293 = vsel %vm1285, %v1281, %v1289
        %v1294 = vsel %vm1286, %v1282, %v1290
        %v1295 = vpack.c.bf16 %v1292, %v1291
        %v1296 = vpack.c.bf16 %v1294, %v1293
        %v1297 = vld [vmem:[%s5] sm:$0xf]
        %v1298 = vld [vmem:[%s5 + $0x4] sm:$0xf]
        %v1299 = vld [vmem:[%s5 + $0x8] sm:$0xf]
        %v1300 = vld [vmem:[%s5 + $0xc] sm:$0xf]
        %v1301 = vld [vmem:[%s537] sm:$0xf]
        %v1302 = vld [vmem:[%s537 + $0x4] sm:$0xf]
        %v1303 = vld [vmem:[%s537 + $0x8] sm:$0xf]
        %v1304 = vld [vmem:[%s537 + $0xc] sm:$0xf]
        %v1305 = vunpack.c.l.bf16 %v1301
        %v1306 = vunpack.c.l.bf16 %v1302
        %v1307 = vunpack.c.l.bf16 %v1303
        %v1308 = vunpack.c.l.bf16 %v1304
        %v1313 = vunpack.c.l.b16 %v1297
        %v1314 = vunpack.c.l.b16 %v1298
        %v1315 = vunpack.c.l.b16 %v1299
        %v1316 = vunpack.c.l.b16 %v1300
        %v1317 = vpack.c.b16 %v1314, %v1313
        %v1318 = vpack.c.b16 %v1316, %v1315
        %v1322 = vsel %vm568, %v1295, 0
        %v1325 = vsel %vm568, %v1296, 0
        %1327 = vmatprep.subr.bf16.mxu0 0
        %1328 = vmatpush1.bf16.msra.mxu0 %v1317
        %1329 = vmatprep.subr.bf16.mxu0 0
        %1330 = vmatpush1.bf16.msra.mxu0 %v1318
        %1331 = vmatprep.subr.bf16.mxu0 0
        %1332 = vmatpush1.bf16.msra.mxu0 0
        %1333 = vmatprep.subr.bf16.mxu0 0
        %1334 = vmatpush1.bf16.msra.mxu0 0
        %1335 = vmatprep.subr.bf16.mxu0 0
        %1336 = vmatpush1.bf16.msra.mxu0 0
        %1337 = vmatprep.subr.bf16.mxu0 0
        %1338 = vmatpush1.bf16.msra.mxu0 0
        %1339 = vmatprep.subr.bf16.mxu0 0
        %1340 = vmatpush1.bf16.msra.mxu0 0
        %1341 = vmatprep.subr.bf16.mxu0 0
        %1342 = vmatpush1.bf16.msra.mxu0 0
        %1343 = vmatprep.subr.bf16.mxu0 0
        %1344 = vmatpush1.bf16.msra.mxu0 0
        %1345 = vmatprep.subr.bf16.mxu0 0
        %1346 = vmatpush1.bf16.msra.mxu0 0
        %1347 = vmatprep.subr.bf16.mxu0 0
        %1348 = vmatpush1.bf16.msra.mxu0 0
        %1349 = vmatprep.subr.bf16.mxu0 0
        %1350 = vmatpush1.bf16.msra.mxu0 0
        %1351 = vmatprep.subr.bf16.mxu0 0
        %1352 = vmatpush1.bf16.msra.mxu0 0
        %1353 = vmatprep.subr.bf16.mxu0 0
        %1354 = vmatpush1.bf16.msra.mxu0 0
        %1355 = vmatprep.subr.bf16.mxu0 0
        %1356 = vmatpush1.bf16.msra.mxu0 0
        %1357 = vmatprep.subr.bf16.mxu0 0
        %1358 = vmatpush1.bf16.msra.mxu0 0
        %1359 = vmatprep.mubr.bf16.mxu0 0
        %1360 = vmatmul.mubr.bf16.gmra.mrb[0].mxu0 %v1322
        %v1361 = vpop.f32.mrb[0].mxu0
        %v1362 = vadd.f32 %v1305, %v1361
        %v1363 = vpop.f32.mrb[0].mxu0
        %v1364 = vpop.f32.mrb[0].mxu0
        %v1365 = vadd.f32 %v1306, %v1364
        %v1366 = vpop.f32.mrb[0].mxu0
        %1367 = vmatprep.mubr.bf16.mxu0 0
        %1368 = vmatmul.mubr.bf16.gmra.mrb[0].mxu0 %v1325
        %v1369 = vpop.f32.mrb[0].mxu0
        %v1370 = vadd.f32 %v1307, %v1369
        %v1371 = vpop.f32.mrb[0].mxu0
        %v1372 = vpop.f32.mrb[0].mxu0
        %v1373 = vadd.f32 %v1308, %v1372
        %v1374 = vpop.f32.mrb[0].mxu0
        %1375 = vdwg.mxu0
        %v1376 = vsel %vm568, %v1362, 0.0
        %1377 = vadd.xlane.f32.xlu0 %v1376
        %v1378 = vpop.xlane.xlu0 %1377
        %v1379 = vsel %vm568, %v1365, 0.0
        %1380 = vadd.xlane.f32.xlu0 %v1379
        %v1381 = vpop.xlane.xlu0 %1380
        %v1382 = vsel %vm568, %v1370, 0.0
        %1383 = vadd.xlane.f32.xlu0 %v1382
        %v1384 = vpop.xlane.xlu0 %1383
        %v1385 = vsel %vm568, %v1373, 0.0
        %1386 = vadd.xlane.f32.xlu0 %v1385
        %v1387 = vpop.xlane.xlu0 %1386
        %v1388 = vmul.f32 %v1378, %v581
        %v1389 = vmul.f32 %v1381, %v581
        %v1390 = vmul.f32 %v1384, %v581
        %v1391 = vmul.f32 %v1387, %v581
        %v1392 = vsub.f32 %v1362, %v1388
        %v1393 = vsub.f32 %v1365, %v1389
        %v1394 = vsub.f32 %v1370, %v1390
        %v1395 = vsub.f32 %v1373, %v1391
        %v1396 = vmul.f32 %v1392, %v1392
        %v1397 = vmul.f32 %v1393, %v1393
        %v1398 = vmul.f32 %v1394, %v1394
        %v1399 = vmul.f32 %v1395, %v1395
        %v1400 = vsel %vm568, %v1396, 0.0
        %1401 = vadd.xlane.f32.xlu0 %v1400
        %v1402 = vpop.xlane.xlu0 %1401
        %v1403 = vsel %vm568, %v1397, 0.0
        %1404 = vadd.xlane.f32.xlu0 %v1403
        %v1405 = vpop.xlane.xlu0 %1404
        %v1406 = vsel %vm568, %v1398, 0.0
        %1407 = vadd.xlane.f32.xlu0 %v1406
        %v1408 = vpop.xlane.xlu0 %1407
        %v1409 = vsel %vm568, %v1399, 0.0
        %1410 = vadd.xlane.f32.xlu0 %v1409
        %v1411 = vpop.xlane.xlu0 %1410
        %v1412 = vmul.f32 %v1402, %v581
        %v1413 = vmul.f32 %v1405, %v581
        %v1414 = vmul.f32 %v1408, %v581
        %v1415 = vmul.f32 %v1411, %v581
        %v1416 = vadd.f32 %v1412, 1e-05
        %v1417 = vadd.f32 %v1413, 1e-05
        %v1418 = vadd.f32 %v1414, 1e-05
        %v1419 = vadd.f32 %v1415, 1e-05
        %v1420 = vrsqrt.pop %v1416
        %v1421 = vrsqrt.pop %v1417
        %v1422 = vrsqrt.pop %v1418
        %v1423 = vrsqrt.pop %v1419
        %v1424 = vmul.f32 %v1392, %v1420
        %v1425 = vmul.f32 %v1393, %v1421
        %v1426 = vmul.f32 %v1394, %v1422
        %v1427 = vmul.f32 %v1395, %v1423
        %v1428 = vld [vmem:[#allocation6] sm:$0x1]
        %v1430 = vlaneseq
        %v1431 = vshrl.u32 %v1430, 7
        %v1432 = vsub.s32 0, %v1431
        %v1433 = vrot.slane %v1428, %v1432
        %v1435 = vmul.f32 %v1424, %v1433
        %v1436 = vmul.f32 %v1425, %v1433
        %v1437 = vmul.f32 %v1426, %v1433
        %v1438 = vmul.f32 %v1427, %v1433
        %v1439 = vld [vmem:[#allocation8] sm:$0x1]
        %v1441 = vlaneseq
        %v1442 = vshrl.u32 %v1441, 7
        %v1443 = vsub.s32 0, %v1442
        %v1444 = vrot.slane %v1439, %v1443
        %v1446 = vadd.f32 %v1435, %v1444
        %v1447 = vadd.f32 %v1436, %v1444
        %v1448 = vadd.f32 %v1437, %v1444
        %v1449 = vadd.f32 %v1438, %v1444
        %v1450 = vpack.c.bf16 %v1447, %v1446
        %v1451 = vpack.c.bf16 %v1449, %v1448
        %v1452 = vld [vmem:[%s10] sm:$0xf]
        %v1453 = vld [vmem:[%s10 + $0x4] sm:$0xf]
        %v1454 = vld [vmem:[%s10 + $0x8] sm:$0xf]
        %v1455 = vld [vmem:[%s10 + $0xc] sm:$0xf]
        %v1456 = vld [vmem:[%s11] sm:$0x1]
        %v1458 = vlaneseq
        %v1459 = vshrl.u32 %v1458, 7
        %v1460 = vsub.s32 0, %v1459
        %v1461 = vrot.slane %v1456, %v1460
        %v1467 = vunpack.c.l.b16 %v1452
        %v1468 = vunpack.c.l.b16 %v1453
        %v1469 = vunpack.c.l.b16 %v1454
        %v1470 = vunpack.c.l.b16 %v1455
        %v1471 = vpack.c.b16 %v1468, %v1467
        %v1472 = vpack.c.b16 %v1470, %v1469
        %v1476 = vsel %vm568, %v1450, 0
        %v1479 = vsel %vm568, %v1451, 0
        %1481 = vmatprep.subr.bf16.mxu0 0
        %1482 = vmatpush1.bf16.msra.mxu0 %v1471
        %1483 = vmatprep.subr.bf16.mxu0 0
        %1484 = vmatpush1.bf16.msra.mxu0 %v1472
        %1485 = vmatprep.subr.bf16.mxu0 0
        %1486 = vmatpush1.bf16.msra.mxu0 0
        %1487 = vmatprep.subr.bf16.mxu0 0
        %1488 = vmatpush1.bf16.msra.mxu0 0
        %1489 = vmatprep.subr.bf16.mxu0 0
        %1490 = vmatpush1.bf16.msra.mxu0 0
        %1491 = vmatprep.subr.bf16.mxu0 0
        %1492 = vmatpush1.bf16.msra.mxu0 0
        %1493 = vmatprep.subr.bf16.mxu0 0
        %1494 = vmatpush1.bf16.msra.mxu0 0
        %1495 = vmatprep.subr.bf16.mxu0 0
        %1496 = vmatpush1.bf16.msra.mxu0 0
        %1497 = vmatprep.subr.bf16.mxu0 0
        %1498 = vmatpush1.bf16.msra.mxu0 0
        %1499 = vmatprep.subr.bf16.mxu0 0
        %1500 = vmatpush1.bf16.msra.mxu0 0
        %1501 = vmatprep.subr.bf16.mxu0 0
        %1502 = vmatpush1.bf16.msra.mxu0 0
        %1503 = vmatprep.subr.bf16.mxu0 0
        %1504 = vmatpush1.bf16.msra.mxu0 0
        %1505 = vmatprep.subr.bf16.mxu0 0
        %1506 = vmatpush1.bf16.msra.mxu0 0
        %1507 = vmatprep.subr.bf16.mxu0 0
        %1508 = vmatpush1.bf16.msra.mxu0 0
        %1509 = vmatprep.subr.bf16.mxu0 0
        %1510 = vmatpush1.bf16.msra.mxu0 0
        %1511 = vmatprep.subr.bf16.mxu0 0
        %1512 = vmatpush1.bf16.msra.mxu0 0
        %1513 = vmatprep.mubr.bf16.mxu0 0
        %1514 = vmatmul.mubr.bf16.gmra.mrb[0].mxu0 %v1476
        %v1515 = vpop.f32.mrb[0].mxu0
        %v1516 = vadd.f32 %v1461, %v1515
        %v1517 = vpop.f32.mrb[0].mxu0
        %v1518 = vpop.f32.mrb[0].mxu0
        %v1519 = vadd.f32 %v1461, %v1518
        %v1520 = vpop.f32.mrb[0].mxu0
        %1521 = vmatprep.mubr.bf16.mxu0 0
        %1522 = vmatmul.mubr.bf16.gmra.mrb[0].mxu0 %v1479
        %v1523 = vpop.f32.mrb[0].mxu0
        %v1524 = vadd.f32 %v1461, %v1523
        %v1525 = vpop.f32.mrb[0].mxu0
        %v1526 = vpop.f32.mrb[0].mxu0
        %v1527 = vadd.f32 %v1461, %v1526
        %v1528 = vpop.f32.mrb[0].mxu0
        %1529 = vdwg.mxu0
        %v1530 = vmax.f32 %v1516, 0.0
        %v1531 = vmax.f32 %v1519, 0.0
        %v1532 = vmax.f32 %v1524, 0.0
        %v1533 = vmax.f32 %v1527, 0.0
        %v1534 = vpack.c.bf16 %v1531, %v1530
        %v1535 = vpack.c.bf16 %v1533, %v1532
        %v1536 = vld [vmem:[%s12] sm:$0xf]
        %v1537 = vld [vmem:[%s12 + $0x4] sm:$0xf]
        %v1538 = vld [vmem:[%s12 + $0x8] sm:$0xf]
        %v1539 = vld [vmem:[%s12 + $0xc] sm:$0xf]
        %v1540 = vld [vmem:[%s12 + $0x10] sm:$0xf]
        %v1541 = vld [vmem:[%s12 + $0x14] sm:$0xf]
        %v1542 = vld [vmem:[%s12 + $0x18] sm:$0xf]
        %v1543 = vld [vmem:[%s12 + $0x1c] sm:$0xf]
        %v1544 = vld [vmem:[%s13] sm:$0x1]
        %v1546 = vlaneseq
        %v1547 = vshrl.u32 %v1546, 7
        %v1548 = vsub.s32 0, %v1547
        %v1549 = vrot.slane %v1544, %v1548
        %v1559 = vunpack.c.l.b16 %v1536
        %v1560 = vunpack.c.l.b16 %v1537
        %v1561 = vunpack.c.l.b16 %v1538
        %v1562 = vunpack.c.l.b16 %v1539
        %v1563 = vunpack.c.l.b16 %v1540
        %v1564 = vunpack.c.l.b16 %v1541
        %v1565 = vunpack.c.l.b16 %v1542
        %v1566 = vunpack.c.l.b16 %v1543
        %v1567 = vpack.c.b16 %v1560, %v1559
        %v1568 = vpack.c.b16 %v1562, %v1561
        %v1569 = vpack.c.b16 %v1564, %v1563
        %v1570 = vpack.c.b16 %v1566, %v1565
        %vm1575 = vcmask 523264
        %v1577 = vsel %vm1575, %v1534, 0
        %v1580 = vsel %vm1575, %v1535, 0
        %1582 = vmatprep.subr.bf16.mxu0 0
        %1583 = vmatpush1.bf16.msra.mxu0 %v1567
        %1584 = vmatprep.subr.bf16.mxu0 0
        %1585 = vmatpush1.bf16.msra.mxu0 %v1568
        %1586 = vmatprep.subr.bf16.mxu0 0
        %1587 = vmatpush1.bf16.msra.mxu0 %v1569
        %1588 = vmatprep.subr.bf16.mxu0 0
        %1589 = vmatpush1.bf16.msra.mxu0 %v1570
        %1590 = vmatprep.subr.bf16.mxu0 0
        %1591 = vmatpush1.bf16.msra.mxu0 0
        %1592 = vmatprep.subr.bf16.mxu0 0
        %1593 = vmatpush1.bf16.msra.mxu0 0
        %1594 = vmatprep.subr.bf16.mxu0 0
        %1595 = vmatpush1.bf16.msra.mxu0 0
        %1596 = vmatprep.subr.bf16.mxu0 0
        %1597 = vmatpush1.bf16.msra.mxu0 0
        %1598 = vmatprep.subr.bf16.mxu0 0
        %1599 = vmatpush1.bf16.msra.mxu0 0
        %1600 = vmatprep.subr.bf16.mxu0 0
        %1601 = vmatpush1.bf16.msra.mxu0 0
        %1602 = vmatprep.subr.bf16.mxu0 0
        %1603 = vmatpush1.bf16.msra.mxu0 0
        %1604 = vmatprep.subr.bf16.mxu0 0
        %1605 = vmatpush1.bf16.msra.mxu0 0
        %1606 = vmatprep.subr.bf16.mxu0 0
        %1607 = vmatpush1.bf16.msra.mxu0 0
        %1608 = vmatprep.subr.bf16.mxu0 0
        %1609 = vmatpush1.bf16.msra.mxu0 0
        %1610 = vmatprep.subr.bf16.mxu0 0
        %1611 = vmatpush1.bf16.msra.mxu0 0
        %1612 = vmatprep.subr.bf16.mxu0 0
        %1613 = vmatpush1.bf16.msra.mxu0 0
        %1614 = vmatprep.mubr.bf16.mxu0 0
        %1615 = vmatmul.mubr.bf16.gmra.mrb[0].mxu0 %v1577
        %v1616 = vpop.f32.mrb[0].mxu0
        %v1617 = vadd.f32 %v1549, %v1616
        %v1618 = vpop.f32.mrb[0].mxu0
        %v1619 = vpop.f32.mrb[0].mxu0
        %v1620 = vadd.f32 %v1549, %v1619
        %v1621 = vpop.f32.mrb[0].mxu0
        %1622 = vmatprep.mubr.bf16.mxu0 0
        %1623 = vmatmul.mubr.bf16.gmra.mrb[0].mxu0 %v1580
        %v1624 = vpop.f32.mrb[0].mxu0
        %v1625 = vadd.f32 %v1549, %v1624
        %v1626 = vpop.f32.mrb[0].mxu0
        %v1627 = vpop.f32.mrb[0].mxu0
        %v1628 = vadd.f32 %v1549, %v1627
        %v1629 = vpop.f32.mrb[0].mxu0
        %1630 = vdwg.mxu0
        %v1631 = vadd.f32 %v1617, %v1362
        %v1632 = vadd.f32 %v1620, %v1365
        %v1633 = vadd.f32 %v1625, %v1370
        %v1634 = vadd.f32 %v1628, %v1373
        %1635 = vst.msk [vmem:[%s557] sm:$0xff] %vm568, %v1631
        %1636 = vst.msk [vmem:[%s557 + $0x8] sm:$0xff] %vm568, %v1632
        %1637 = vst.msk [vmem:[%s557 + $0x10] sm:$0xff] %vm568, %v1633
        %1638 = vst.msk [vmem:[%s557 + $0x18] sm:$0xff] %vm568, %v1634
        %s1639 = smul.u32 4, %s27
        %p1640 = scmp.lt.s32.totalorder %s1639, 7
        %s1641 = scalar_select %p1640, %s1639, 7
        %s1642 = smul.addr %s1641, 8
        %s1643 = scalar_lea.vmem %s14, %s1642
        // Predicated region
        $region96: #{tpu_custom_call.1} parent=75 // pred_check
          %p1644 = pneg %p354
        $region97: #{tpu_custom_call.1} parent=75 // pred_check_branch
          %1646 = sbr.rel (%p1644) target = $region99
        $region98: #{tpu_custom_call.1} parent=75 // pred_region
          %s1647 = smul.u32 4, %s27
        $region99: #{tpu_custom_call.1} parent=75 // pred_fallthru
          _
      $region76: #{tpu_custom_call.1} parent=5 // pred_fallthru
        _
      %p1648 = scmp.le.s32.totalorder 2, %s22
      // Predicated region
      $region100: #{tpu_custom_call.1} parent=5 // pred_check
        %p1649 = pneg %p1648
      $region101: #{tpu_custom_call.1} parent=5 // pred_check_branch
        %1651 = sbr.rel (%p1649) target = $region103
      $region102: #{tpu_custom_call.1} parent=5 // pred_region
        %s1652 = ssub.s32 %s22, 2
        // Predicated region
        $region104: #{tpu_custom_call.1} parent=102 // pred_check
          %p1653 = pneg %p360
        $region105: #{tpu_custom_call.1} parent=102 // pred_check_branch
          %1655 = sbr.rel (%p1653) target = $region107
        $region106: #{tpu_custom_call.1} parent=102 // pred_region
          %s1656 = smul.u32 4, %s28
          %p1657 = scmp.lt.s32.totalorder %s1656, 7
          %s1658 = scalar_select %p1657, %s1656, 7
          %s1659 = smul.addr %s1658, 8
          %s1660 = scalar_lea.vmem %s14, %s1659
        $region107: #{tpu_custom_call.1} parent=102 // pred_fallthru
          _
      $region103: #{tpu_custom_call.1} parent=5 // pred_fallthru
        _
    $region6: #{tpu_custom_call.1} parent=1 // loop_footer
      %s26 = sadd.s32 1, %s22
    $region7: #{tpu_custom_call.1} parent=1 // loop_footer_branch
      %21 = sbr.rel target = $region3
    $region8: #{tpu_custom_call.1} parent=1 // loop_exit
      _
    %1661 = vsyncpa [#allocation5], 1
    %s1662 = scalar_lea.sflag [#allocation5], 1
    %1663 = vsyncpa %s1662, 1
    %1664 = vsyncpa [#allocation7], 1

</llo_original>
